<compile_context>
chip_gen: v7x
topology: tpu7x:2x2x1
jax: 0.10.0
libtpu: 0.0.40
codegen_flags: <defaults>
</compile_context>

<pallas_src>
import jax
import jax.numpy as jnp
from jax import lax
from jax.experimental import pallas as pl
from jax.experimental.pallas import tpu as pltpu


_LANE_CAP = 256                    # max folded lane width (bounds pair-matrix size)
_BLOCK_F32_BUDGET = 8192 * 128     # f32 elements per pred/loc input block (~4 MiB)
_DEFAULT_VMEM_CAP = 48 << 20       # safe on v7x (64 MiB / TensorCore)
_LARGE_VMEM_CAP = 96 << 20         # v5e / v6e (128 MiB / TensorCore)
_MIN_ROWS = 32                     # tiny-input row padding (satisfies int8 (32,128) tile)


def _cdiv(a, b):
    return (a + b - 1) // b


def _round_up(a, b):
    return _cdiv(a, b) * b


def _tpu_caps():
    """(num_tensorcores, vmem_cap_bytes) with conservative fall-backs."""
    nc, vmem_cap = 1, _DEFAULT_VMEM_CAP
    try:
        info = pltpu.get_tpu_info()
    except Exception:
        return nc, vmem_cap
    for attr in ("num_cores", "core_count", "num_tensorcores",
                 "tensorcores_per_chip", "cores_per_chip"):
        v = getattr(info, attr, None)
        if isinstance(v, int) and v in (1, 2):   # only trust sane TC counts
            nc = v
            break
    for attr in ("vmem_capacity_bytes", "vmem_bytes", "vmem_size_bytes"):
        v = getattr(info, attr, None)
        if isinstance(v, int) and v > 0:
            if v >= (100 << 20):
                vmem_cap = _LARGE_VMEM_CAP
            break
    return nc, vmem_cap


def _grid_semantics(num_cores):
    if num_cores > 1 and hasattr(pltpu, "CORE_PARALLEL"):
        # Actually split the leading axis across TensorCores (v7x / megacore parts).
        return (pltpu.CORE_PARALLEL, pltpu.ARBITRARY)
    return ("arbitrary", "arbitrary")


def _fold_geometry(bn, T):
    """Pick agent-group G folded into lanes.  Returns (G, padded_bn)."""
    width = 2 * T
    gmax = max(1, _LANE_CAP // width)
    gdiv = 1
    for g in range(min(gmax, bn), 0, -1):
        if bn % g == 0:
            gdiv = g
            break
    if gdiv * width >= 128 or gdiv == gmax or gdiv == bn:
        return gdiv, bn
    # Bad divisor (e.g. prime bn with small T): pad bn up to a lane-dense group so every
    # DMA burst / vreg is >=128 lanes wide instead of falling back to sparse rows.
    return gmax, _round_up(bn, gmax)


def _row_tiling(rows, lane_width, row_align):
    lane_pad = _round_up(lane_width, 128)
    tr_cap = max(row_align, (_BLOCK_F32_BUDGET // lane_pad) // row_align * row_align)
    tr = rows if rows <= tr_cap else tr_cap     # full-extent single tile when it fits
    nt = _cdiv(rows, tr)
    return tr, nt, lane_pad


def _masked_stats_call(rows, T, G, in_dtype, num_cores, vmem_cap):
    """pallas_call computing (ade_sum, ade_cnt, fde_sum, fde_cnt) as (num_cores, 8)."""
    L1 = G * T              # (agent, t) points per folded row == mask lane width
    L2 = 2 * L1             # interleaved x/y lanes per folded row
    TR, NT, lane2 = _row_tiling(rows, L2, row_align=32)   # 32: int8 mask sublane tile
    lane1 = _round_up(L1, 128)
    TPC = _cdiv(NT, num_cores)

    def kernel(p_ref, l_ref, m_ref, pair_ref, out_ref, acc_a, acc_c):
        c = pl.program_id(0)
        k = pl.program_id(1)

        @pl.when(k == 0)
        def _init():
            acc_a[...] = jnp.zeros_like(acc_a)
            acc_c[...] = jnp.zeros_like(acc_c)

        d = p_ref[...].astype(jnp.float32) - l_ref[...].astype(jnp.float32)
        m = m_ref[...].astype(jnp.float32)          # int8 -> f32 in-kernel (VPU)
        # Resident pair matrix folds interleaved (x, y) lanes into per-point squared
        # distances on the otherwise-idle MXU, aligned with the mask's lane layout.
        # precision=HIGHEST: keep f32 operands exact (multi-pass); cost hidden under HBM.
        d2 = jnp.dot(d * d, pair_ref[...],
                     preferred_element_type=jnp.float32,
                     precision=lax.Precision.HIGHEST)
        dist = jnp.sqrt(d2)                          # (TR, L1)

        tile = c * TPC + k
        full = (tile + 1) * TR <= rows               # interior tile: all rows are real

        @pl.when(full)
        def _fast():                                  # no validity selects
            acc_a[...] += dist * m
            acc_c[...] += m

        @pl.when(jnp.logical_not(full))
        def _edge():
            # Ragged last tile / clamped duplicate tile: exclude out-of-range rows
            # (also protects against NaN/Inf garbage in the OOB part of the block).
            rid = tile * TR + lax.broadcasted_iota(jnp.int32, (TR, L1), 0)
            valid = rid < rows
            mv = jnp.where(valid, m, 0.0)
            acc_a[...] += jnp.where(valid, dist, 0.0) * mv
            acc_c[...] += mv

        @pl.when(k == pl.num_programs(1) - 1)
        def _finalize():
            # Sublane-reduce first so the FDE lane mask + scalar sums act on (1, L1).
            a1 = jnp.sum(acc_a[...], axis=0, keepdims=True)
            c1 = jnp.sum(acc_c[...], axis=0, keepdims=True)
            is_last = (lax.broadcasted_iota(jnp.int32, (1, L1), 1) % T) == (T - 1)
            out_ref[0, 0] = jnp.sum(a1)                             # ADE numerator
            out_ref[0, 1] = jnp.sum(c1)                             # ADE count
            out_ref[0, 2] = jnp.sum(jnp.where(is_last, a1, 0.0))    # FDE numerator
            out_ref[0, 3] = jnp.sum(jnp.where(is_last, c1, 0.0))    # FDE count
            out_ref[0, 4] = 0.0
            out_ref[0, 5] = 0.0
            out_ref[0, 6] = 0.0
            out_ref[0, 7] = 0.0

    def row_map(c, k):
        # Clamp so a possibly-empty trailing tile re-reads an in-bounds block; its rows
        # are excluded by the `_edge` branch (keeps every DMA in bounds).
        return (jnp.minimum(c * TPC + k, NT - 1), 0)

    itemsize = jnp.dtype(in_dtype).itemsize
    cost = pl.CostEstimate(
        flops=int(rows * (3 * L2 + 2 * L2 * L1 + 4 * L1)),
        transcendentals=int(rows * L1),
        bytes_accessed=int(2 * rows * L2 * itemsize    # pred / location
                           + rows * L1                 # int8 mask
                           + L2 * L1 * 4               # resident pair matrix (once)
                           + num_cores * 32))

    vmem_est = (2 * 2 * TR * lane2 * itemsize          # pred/loc, double-buffered
                + 2 * TR * lane1 * 1                   # int8 mask, double-buffered
                + 2 * L2 * lane1 * 4                   # pair matrix
                + 2 * TR * lane1 * 4)                  # f32 accumulators
    vmem_limit = int(min(vmem_cap, max(32 << 20, vmem_est + (16 << 20))))

    return pl.pallas_call(
        kernel,
        out_shape=jax.ShapeDtypeStruct((num_cores, 8), jnp.float32),
        grid_spec=pltpu.PrefetchScalarGridSpec(
            num_scalar_prefetch=0,
            grid=(num_cores, TPC),
            in_specs=[pl.BlockSpec((TR, L2), row_map),
                      pl.BlockSpec((TR, L2), row_map),
                      pl.BlockSpec((TR, L1), row_map),
                      pl.BlockSpec((L2, L1), lambda c, k: (0, 0))],   # stays resident
            out_specs=pl.BlockSpec((1, 8), lambda c, k: (c, 0),
                                   memory_space=pltpu.MemorySpace.SMEM),
            scratch_shapes=[pltpu.VMEM((TR, L1), jnp.float32),
                            pltpu.VMEM((TR, L1), jnp.float32)]),
        compiler_params=pltpu.CompilerParams(
            dimension_semantics=_grid_semantics(num_cores),
            vmem_limit_bytes=vmem_limit),
        cost_estimate=cost,
    )


def _mse_stats_call(rows, L, in_dtype, num_cores, vmem_cap):
    """Slim MSE-only kernel for the mask=None path: sum((pred - y_diff)^2)."""
    TR, NT, lane_pad = _row_tiling(rows, L, row_align=32)
    TPC = _cdiv(NT, num_cores)

    def kernel(p_ref, y_ref, out_ref, acc):
        c = pl.program_id(0)
        k = pl.program_id(1)

        @pl.when(k == 0)
        def _init():
            acc[...] = jnp.zeros_like(acc)

        d = p_ref[...].astype(jnp.float32) - y_ref[...].astype(jnp.float32)
        sq = d * d
        tile = c * TPC + k
        full = (tile + 1) * TR <= rows

        @pl.when(full)
        def _fast():
            acc[...] += sq

        @pl.when(jnp.logical_not(full))
        def _edge():
            rid = tile * TR + lax.broadcasted_iota(jnp.int32, (TR, L), 0)
            acc[...] += jnp.where(rid < rows, sq, 0.0)

        @pl.when(k == pl.num_programs(1) - 1)
        def _finalize():
            out_ref[0, 0] = jnp.sum(acc[...])
            for j in range(1, 8):
                out_ref[0, j] = 0.0

    def row_map(c, k):
        return (jnp.minimum(c * TPC + k, NT - 1), 0)

    itemsize = jnp.dtype(in_dtype).itemsize
    cost = pl.CostEstimate(flops=int(3 * rows * L), transcendentals=0,
                           bytes_accessed=int(2 * rows * L * itemsize + num_cores * 32))
    vmem_est = 2 * 2 * TR * lane_pad * itemsize + TR * lane_pad * 4
    vmem_limit = int(min(vmem_cap, max(32 << 20, vmem_est + (16 << 20))))

    return pl.pallas_call(
        kernel,
        out_shape=jax.ShapeDtypeStruct((num_cores, 8), jnp.float32),
        grid_spec=pltpu.PrefetchScalarGridSpec(
            num_scalar_prefetch=0,
            grid=(num_cores, TPC),
            in_specs=[pl.BlockSpec((TR, L), row_map),
                      pl.BlockSpec((TR, L), row_map)],
            out_specs=pl.BlockSpec((1, 8), lambda c, k: (c, 0),
                                   memory_space=pltpu.MemorySpace.SMEM),
            scratch_shapes=[pltpu.VMEM((TR, L), jnp.float32)]),
        compiler_params=pltpu.CompilerParams(
            dimension_semantics=_grid_semantics(num_cores),
            vmem_limit_bytes=vmem_limit),
        cost_estimate=cost,
    )


def scene_loss(pred, location, y_diff, mask=None, reduction='mean'):
    """Pallas TPU implementation of SceneLoss.forward.

    pred, location, y_diff: (B, N, T, 2).  mask: (B, N, T) bool or None.
    mask=None: returns summed MSE (divided by batch if reduction == 'mean'; 'sum' and
    'none' both return the summed value, matching the reference module).
    mask given: returns (ade_mean, fde_mean); `reduction` is ignored (as in the module).
    """
    if reduction not in ('mean', 'sum', 'none'):
        raise NotImplementedError('[VectorLoss]: The reduction has not been implemented!')
    B, N, T, C = pred.shape
    assert C == 2, 'SceneLoss expects 2-D (x, y) trajectories'
    bn = B * N
    num_cores, vmem_cap = _tpu_caps()

    # Fold G agents into the lane axis (free, contiguous reshape; padded only if B*N has
    # no lane-dense divisor).
    G, bn_pad = _fold_geometry(bn, T)
    rows = bn_pad // G
    L1, L2 = G * T, 2 * G * T
    rows_k = max(rows, _MIN_ROWS)

    def _to_rows(a, width):
        a2 = a.reshape(bn, width)
        if bn_pad != bn:
            a2 = jnp.pad(a2, ((0, bn_pad - bn), (0, 0)))
        a2 = a2.reshape(rows, G * width)
        if rows < _MIN_ROWS:                      # tiny inputs only
            a2 = jnp.pad(a2, ((0, _MIN_ROWS - rows), (0, 0)))
        return a2

    if mask is None:
        p = _to_rows(pred, 2 * T)
        y = _to_rows(y_diff, 2 * T)
        stats = _mse_stats_call(rows_k, L2, p.dtype, num_cores, vmem_cap)(p, y)
        l_traj = jnp.sum(stats[:, 0])
        if reduction == 'mean':
            l_traj = l_traj / B
        return l_traj

    p = _to_rows(pred, 2 * T)
    loc = _to_rows(location, 2 * T)
    m = _to_rows(mask.astype(jnp.int8), T)        # 1 B/elem stream; f32 cast in-kernel
    # Pair-sum matrix S[j, q] = (j // 2 == q): built once in the wrapper (constant),
    # kept resident in VMEM by its constant index_map.
    pair = (jnp.arange(L2, dtype=jnp.int32)[:, None] // 2
            == jnp.arange(L1, dtype=jnp.int32)[None, :]).astype(jnp.float32)

    stats = _masked_stats_call(rows_k, T, G, p.dtype, num_cores, vmem_cap)(p, loc, m, pair)
    s = jnp.sum(stats, axis=0)
    # NOTE: an all-false mask (globally or at t == T-1) yields NaN here, matching the
    # reference torch.mean(masked_select(...)) semantics.
    ade_mean = s[0] / s[1]
    fde_mean = s[2] / s[3]
    return ade_mean, fde_mean
    # TODO(synk): for very long horizons (T > 128) the pair-sum matmul grows as O(T^2)
    # and can become MXU-bound; a sublane-stacked x/y layout would be preferable there.


def _ref_loss(pred, location, y_diff, mask, reduction):
    # Pure-JAX reference mirroring the PyTorch forward.
    if mask is None:
        l = jnp.sum((pred.astype(jnp.float32) - y_diff.astype(jnp.float32)) ** 2)
        if reduction == 'mean':
            l = l / pred.shape[0]
        return l
    mf = mask.astype(jnp.float32)
    ade = jnp.sqrt(jnp.sum((pred - location).astype(jnp.float32) ** 2, axis=-1))
    ade_mean = jnp.sum(ade * mf) / jnp.sum(mf)
    fde = jnp.sqrt(jnp.sum((pred[:, :, -1, :] - location[:, :, -1, :]).astype(jnp.float32) ** 2,
                           axis=-1))
    fde_mean = jnp.sum(fde * mf[:, :, -1]) / jnp.sum(mf[:, :, -1])
    return ade_mean, fde_mean


if __name__ == "__main__":
    key = jax.random.PRNGKey(0)
    k1, k2, k3, k4 = jax.random.split(key, 4)
    B, N, T = 2, 4, 8  # batch, num agents, timesteps; last dim = (x, y)

    pred = jax.random.normal(k1, (B, N, T, 2), jnp.float32)
    location = jax.random.normal(k2, (B, N, T, 2), jnp.float32)
    y_diff = jax.random.normal(k3, (B, N, T, 2), jnp.float32)
    mask = jax.random.uniform(k4, (B, N, T)) > 0.3
    mask = mask.at[:, 0, -1].set(True)  # guarantee at least one valid final step

    # Masked path: (ade_mean, fde_mean)
    ade, fde = scene_loss(pred, location, y_diff, mask, reduction='mean')
    jax.block_until_ready((ade, fde))

    # Unmasked path: summed MSE (divided by batch for 'mean')
    l_traj = scene_loss(pred, location, y_diff, None, reduction='mean')
    jax.block_until_ready(l_traj)

    r_ade, r_fde = _ref_loss(pred, location, y_diff, mask, 'mean')
    r_l = _ref_loss(pred, location, y_diff, None, 'mean')
    assert jnp.allclose(ade, r_ade, rtol=1e-5, atol=1e-5), (ade, r_ade)
    assert jnp.allclose(fde, r_fde, rtol=1e-5, atol=1e-5), (fde, r_fde)
    assert jnp.allclose(l_traj, r_l, rtol=1e-5, atol=1e-5), (l_traj, r_l)

    print("KERNEL_OK")
</pallas_src>

<mosaic_0001>
module attributes {stable_mosaic.version = 11 : i64} {
  func.func @kernel(%arg0: i32, %arg1: i32, %arg2: memref<32x128xf32, #tpu.memory_space<vmem>>, %arg3: memref<32x128xf32, #tpu.memory_space<vmem>>, %arg4: memref<32x64xi8, #tpu.memory_space<vmem>>, %arg5: memref<128x64xf32, #tpu.memory_space<vmem>>, %arg6: memref<1x8xf32, #tpu.memory_space<smem>>, %arg7: memref<32x64xf32, #tpu.memory_space<vmem>>, %arg8: memref<32x64xf32, #tpu.memory_space<vmem>>) attributes {dimension_semantics = [#tpu.dimension_semantics<arbitrary>, #tpu.dimension_semantics<arbitrary>], iteration_bounds = array<i64: 1, 1>, scalar_prefetch = 0 : i64, scratch_operands = 2 : i64, tpu.core_type = #tpu.core_type<tc>, window_params = [{transform_indices = @transform_0, window_bounds = array<i64: 32, 128>}, {transform_indices = @transform_1, window_bounds = array<i64: 32, 128>}, {transform_indices = @transform_2, window_bounds = array<i64: 32, 64>}, {pipeline_mode = #tpu.pipeline_mode<synchronous>, transform_indices = @transform_3, window_bounds = array<i64: 128, 64>}, {transform_indices = @transform_4, window_bounds = array<i64: 1, 8>}]} {
    %c0_i32 = arith.constant 0 : i32
    %0 = arith.cmpi eq, %arg1, %c0_i32 : i32
    %1 = arith.extui %0 : i1 to i32
    %c0_i32_0 = arith.constant 0 : i32
    %2 = arith.cmpi ne, %1, %c0_i32_0 : i32
    scf.if %2 {
      %cst_14 = arith.constant 0.000000e+00 : f32
      %25 = vector.broadcast %cst_14 : f32 to vector<32x64xf32>
      %c0_15 = arith.constant 0 : index
      %c0_16 = arith.constant 0 : index
      %26 = vector.load %arg7[%c0_15, %c0_16] : memref<32x64xf32, #tpu.memory_space<vmem>>, vector<32x64xf32>
      tpu.vector_store %arg7[%c0_15, %c0_16], %25 {strides = array<i32>} : memref<32x64xf32, #tpu.memory_space<vmem>>, vector<32x64xf32>,
      %cst_17 = arith.constant 0.000000e+00 : f32
      %27 = vector.broadcast %cst_17 : f32 to vector<32x64xf32>
      %c0_18 = arith.constant 0 : index
      %c0_19 = arith.constant 0 : index
      %28 = vector.load %arg8[%c0_18, %c0_19] : memref<32x64xf32, #tpu.memory_space<vmem>>, vector<32x64xf32>
      tpu.vector_store %arg8[%c0_18, %c0_19], %27 {strides = array<i32>} : memref<32x64xf32, #tpu.memory_space<vmem>>, vector<32x64xf32>,
    } else {
    }
    %c0 = arith.constant 0 : index
    %c0_1 = arith.constant 0 : index
    %3 = vector.load %arg2[%c0, %c0_1] : memref<32x128xf32, #tpu.memory_space<vmem>>, vector<32x128xf32>
    %c0_2 = arith.constant 0 : index
    %c0_3 = arith.constant 0 : index
    %4 = vector.load %arg3[%c0_2, %c0_3] : memref<32x128xf32, #tpu.memory_space<vmem>>, vector<32x128xf32>
    %5 = arith.subf %3, %4 : vector<32x128xf32>
    %c0_4 = arith.constant 0 : index
    %c0_5 = arith.constant 0 : index
    %6 = vector.load %arg4[%c0_4, %c0_5] : memref<32x64xi8, #tpu.memory_space<vmem>>, vector<32x64xi8>
    %7 = arith.sitofp %6 : vector<32x64xi8> to vector<32x64xf32>
    %8 = arith.mulf %5, %5 : vector<32x128xf32>
    %c0_6 = arith.constant 0 : index
    %c0_7 = arith.constant 0 : index
    %9 = vector.load %arg5[%c0_6, %c0_7] : memref<128x64xf32, #tpu.memory_space<vmem>>, vector<128x64xf32>
    %cst = arith.constant dense<0.000000e+00> : vector<32x64xf32>
    %10 = tpu.matmul %8, %9, %cst {dimension_numbers = #tpu.dot_dimension_numbers<[1], [0], [0], [1], [0, 0, 1, 1], [], []>, precision = #tpu.contract_precision<fp32>} : vector<32x128xf32>, vector<128x64xf32>, vector<32x64xf32> -> vector<32x64xf32>
    %11 = math.sqrt %10 : vector<32x64xf32>
    %c1_i32 = arith.constant 1 : i32
    %12 = arith.muli %arg0, %c1_i32 : i32
    %13 = arith.addi %12, %arg1 : i32
    %c1_i32_8 = arith.constant 1 : i32
    %14 = arith.addi %13, %c1_i32_8 : i32
    %c32_i32 = arith.constant 32 : i32
    %15 = arith.muli %14, %c32_i32 : i32
    %c32_i32_9 = arith.constant 32 : i32
    %16 = arith.cmpi sle, %15, %c32_i32_9 : i32
    %17 = arith.extui %16 : i1 to i32
    %c0_i32_10 = arith.constant 0 : i32
    %18 = arith.cmpi ne, %17, %c0_i32_10 : i32
    scf.if %18 {
      %c0_14 = arith.constant 0 : index
      %c0_15 = arith.constant 0 : index
      %25 = vector.load %arg7[%c0_14, %c0_15] : memref<32x64xf32, #tpu.memory_space<vmem>>, vector<32x64xf32>
      %26 = arith.mulf %11, %7 : vector<32x64xf32>
      %27 = arith.addf %25, %26 : vector<32x64xf32>
      %c0_16 = arith.constant 0 : index
      %c0_17 = arith.constant 0 : index
      %28 = vector.load %arg7[%c0_16, %c0_17] : memref<32x64xf32, #tpu.memory_space<vmem>>, vector<32x64xf32>
      tpu.vector_store %arg7[%c0_16, %c0_17], %27 {strides = array<i32>} : memref<32x64xf32, #tpu.memory_space<vmem>>, vector<32x64xf32>,
      %c0_18 = arith.constant 0 : index
      %c0_19 = arith.constant 0 : index
      %29 = vector.load %arg8[%c0_18, %c0_19] : memref<32x64xf32, #tpu.memory_space<vmem>>, vector<32x64xf32>
      %30 = arith.addf %29, %7 : vector<32x64xf32>
      %c0_20 = arith.constant 0 : index
      %c0_21 = arith.constant 0 : index
      %31 = vector.load %arg8[%c0_20, %c0_21] : memref<32x64xf32, #tpu.memory_space<vmem>>, vector<32x64xf32>
      tpu.vector_store %arg8[%c0_20, %c0_21], %30 {strides = array<i32>} : memref<32x64xf32, #tpu.memory_space<vmem>>, vector<32x64xf32>,
    } else {
    }
    %true = arith.constant true
    %19 = arith.xori %16, %true : i1
    %20 = arith.extui %19 : i1 to i32
    %c0_i32_11 = arith.constant 0 : i32
    %21 = arith.cmpi ne, %20, %c0_i32_11 : i32
    scf.if %21 {
      %c32_i32_14 = arith.constant 32 : i32
      %25 = arith.muli %13, %c32_i32_14 : i32
      %26 = tpu.iota {dimensions = array<i32: 0>} : vector<32x64xi32>
      %27 = vector.broadcast %25 : i32 to vector<32x64xi32>
      %28 = arith.addi %27, %26 : vector<32x64xi32>
      %c32_i32_15 = arith.constant 32 : i32
      %29 = vector.broadcast %c32_i32_15 : i32 to vector<32x64xi32>
      %30 = arith.cmpi slt, %28, %29 : vector<32x64xi32>
      %cst_16 = arith.constant 0.000000e+00 : f32
      %31 = vector.broadcast %cst_16 : f32 to vector<32x64xf32>
      %32 = arith.select %30, %7, %31 : vector<32x64xi1>, vector<32x64xf32>
      %c0_17 = arith.constant 0 : index
      %c0_18 = arith.constant 0 : index
      %33 = vector.load %arg7[%c0_17, %c0_18] : memref<32x64xf32, #tpu.memory_space<vmem>>, vector<32x64xf32>
      %cst_19 = arith.constant 0.000000e+00 : f32
      %34 = vector.broadcast %cst_19 : f32 to vector<32x64xf32>
      %35 = arith.select %30, %11, %34 : vector<32x64xi1>, vector<32x64xf32>
      %36 = arith.mulf %35, %32 : vector<32x64xf32>
      %37 = arith.addf %33, %36 : vector<32x64xf32>
      %c0_20 = arith.constant 0 : index
      %c0_21 = arith.constant 0 : index
      %38 = vector.load %arg7[%c0_20, %c0_21] : memref<32x64xf32, #tpu.memory_space<vmem>>, vector<32x64xf32>
      tpu.vector_store %arg7[%c0_20, %c0_21], %37 {strides = array<i32>} : memref<32x64xf32, #tpu.memory_space<vmem>>, vector<32x64xf32>,
      %c0_22 = arith.constant 0 : index
      %c0_23 = arith.constant 0 : index
      %39 = vector.load %arg8[%c0_22, %c0_23] : memref<32x64xf32, #tpu.memory_space<vmem>>, vector<32x64xf32>
      %40 = arith.addf %39, %32 : vector<32x64xf32>
      %c0_24 = arith.constant 0 : index
      %c0_25 = arith.constant 0 : index
      %41 = vector.load %arg8[%c0_24, %c0_25] : memref<32x64xf32, #tpu.memory_space<vmem>>, vector<32x64xf32>
      tpu.vector_store %arg8[%c0_24, %c0_25], %40 {strides = array<i32>} : memref<32x64xf32, #tpu.memory_space<vmem>>, vector<32x64xf32>,
    } else {
    }
    %c0_i32_12 = arith.constant 0 : i32
    %22 = arith.cmpi eq, %arg1, %c0_i32_12 : i32
    %23 = arith.extui %22 : i1 to i32
    %c0_i32_13 = arith.constant 0 : i32
    %24 = arith.cmpi ne, %23, %c0_i32_13 : i32
    scf.if %24 {
      %c0_14 = arith.constant 0 : index
      %c0_15 = arith.constant 0 : index
      %25 = vector.load %arg7[%c0_14, %c0_15] : memref<32x64xf32, #tpu.memory_space<vmem>>, vector<32x64xf32>
      %cst_16 = arith.constant dense<0.000000e+00> : vector<64xf32>
      %26 = vector.multi_reduction <add>, %25, %cst_16 [0] : vector<32x64xf32> to vector<64xf32>
      %27 = vector.shape_cast %26 : vector<64xf32> to vector<1x64xf32>
      %c0_17 = arith.constant 0 : index
      %c0_18 = arith.constant 0 : index
      %28 = vector.load %arg8[%c0_17, %c0_18] : memref<32x64xf32, #tpu.memory_space<vmem>>, vector<32x64xf32>
      %cst_19 = arith.constant dense<0.000000e+00> : vector<64xf32>
      %29 = vector.multi_reduction <add>, %28, %cst_19 [0] : vector<32x64xf32> to vector<64xf32>
      %30 = vector.shape_cast %29 : vector<64xf32> to vector<1x64xf32>
      %31 = tpu.iota {dimensions = array<i32: 1>} : vector<1x64xi32>
      %c8_i32 = arith.constant 8 : i32
      %c0_i32_20 = arith.constant 0 : i32
      %32 = arith.cmpi eq, %c8_i32, %c0_i32_20 : i32
      %c1_i32_21 = arith.constant 1 : i32
      %33 = arith.select %32, %c1_i32_21, %c8_i32 : i32
      %34 = vector.broadcast %33 : i32 to vector<1x64xi32>
      %35 = arith.remsi %31, %34 : vector<1x64xi32>
      %c0_i32_22 = arith.constant 0 : i32
      %36 = vector.broadcast %c0_i32_22 : i32 to vector<1x64xi32>
      %37 = arith.cmpi ne, %35, %36 : vector<1x64xi32>
      %c0_i32_23 = arith.constant 0 : i32
      %38 = vector.broadcast %c0_i32_23 : i32 to vector<1x64xi32>
      %39 = arith.cmpi slt, %35, %38 : vector<1x64xi32>
      %c0_i32_24 = arith.constant 0 : i32
      %40 = arith.cmpi slt, %33, %c0_i32_24 : i32
      %41 = vector.broadcast %40 : i1 to vector<1x64xi1>
      %42 = vector.broadcast %41 : vector<1x64xi1> to vector<1x64xi1>
      %43 = arith.xori %39, %42 : vector<1x64xi1>
      %44 = arith.andi %43, %37 : vector<1x64xi1>
      %45 = vector.broadcast %33 : i32 to vector<1x64xi32>
      %46 = arith.addi %35, %45 : vector<1x64xi32>
      %47 = arith.select %44, %46, %35 : vector<1x64xi1>, vector<1x64xi32>
      %c7_i32 = arith.constant 7 : i32
      %48 = vector.broadcast %c7_i32 : i32 to vector<1x64xi32>
      %49 = arith.cmpi eq, %47, %48 : vector<1x64xi32>
      %50 = vector.shape_cast %27 : vector<1x64xf32> to vector<1x1x64xf32>
      %cst_25 = arith.constant dense<0.000000e+00> : vector<1xf32>
      %51 = vector.multi_reduction <add>, %50, %cst_25 [1, 2] : vector<1x1x64xf32> to vector<1xf32>
      %52 = vector.shape_cast %51 : vector<1xf32> to vector<1x1x1xf32>
      %53 = vector.extract %52[0, 0, 0] : f32 from vector<1x1x1xf32>
      %c0_26 = arith.constant 0 : index
      %c0_27 = arith.constant 0 : index
      %54 = memref.load %arg6[%c0_26, %c0_27] : memref<1x8xf32, #tpu.memory_space<smem>>
      memref.store %53, %arg6[%c0_26, %c0_27] : memref<1x8xf32, #tpu.memory_space<smem>>
      %55 = vector.shape_cast %30 : vector<1x64xf32> to vector<1x1x64xf32>
      %cst_28 = arith.constant dense<0.000000e+00> : vector<1xf32>
      %56 = vector.multi_reduction <add>, %55, %cst_28 [1, 2] : vector<1x1x64xf32> to vector<1xf32>
      %57 = vector.shape_cast %56 : vector<1xf32> to vector<1x1x1xf32>
      %58 = vector.extract %57[0, 0, 0] : f32 from vector<1x1x1xf32>
      %c0_29 = arith.constant 0 : index
      %c1 = arith.constant 1 : index
      %59 = memref.load %arg6[%c0_29, %c1] : memref<1x8xf32, #tpu.memory_space<smem>>
      memref.store %58, %arg6[%c0_29, %c1] : memref<1x8xf32, #tpu.memory_space<smem>>
      %cst_30 = arith.constant 0.000000e+00 : f32
      %60 = vector.broadcast %cst_30 : f32 to vector<1x64xf32>
      %61 = arith.select %49, %27, %60 : vector<1x64xi1>, vector<1x64xf32>
      %62 = vector.shape_cast %61 : vector<1x64xf32> to vector<1x1x64xf32>
      %cst_31 = arith.constant dense<0.000000e+00> : vector<1xf32>
      %63 = vector.multi_reduction <add>, %62, %cst_31 [1, 2] : vector<1x1x64xf32> to vector<1xf32>
      %64 = vector.shape_cast %63 : vector<1xf32> to vector<1x1x1xf32>
      %65 = vector.extract %64[0, 0, 0] : f32 from vector<1x1x1xf32>
      %c0_32 = arith.constant 0 : index
      %c2 = arith.constant 2 : index
      %66 = memref.load %arg6[%c0_32, %c2] : memref<1x8xf32, #tpu.memory_space<smem>>
      memref.store %65, %arg6[%c0_32, %c2] : memref<1x8xf32, #tpu.memory_space<smem>>
      %cst_33 = arith.constant 0.000000e+00 : f32
      %67 = vector.broadcast %cst_33 : f32 to vector<1x64xf32>
      %68 = arith.select %49, %30, %67 : vector<1x64xi1>, vector<1x64xf32>
      %69 = vector.shape_cast %68 : vector<1x64xf32> to vector<1x1x64xf32>
      %cst_34 = arith.constant dense<0.000000e+00> : vector<1xf32>
      %70 = vector.multi_reduction <add>, %69, %cst_34 [1, 2] : vector<1x1x64xf32> to vector<1xf32>
      %71 = vector.shape_cast %70 : vector<1xf32> to vector<1x1x1xf32>
      %72 = vector.extract %71[0, 0, 0] : f32 from vector<1x1x1xf32>
      %c0_35 = arith.constant 0 : index
      %c3 = arith.constant 3 : index
      %73 = memref.load %arg6[%c0_35, %c3] : memref<1x8xf32, #tpu.memory_space<smem>>
      memref.store %72, %arg6[%c0_35, %c3] : memref<1x8xf32, #tpu.memory_space<smem>>
      %cst_36 = arith.constant 0.000000e+00 : f32
      %c0_37 = arith.constant 0 : index
      %c4 = arith.constant 4 : index
      %74 = memref.load %arg6[%c0_37, %c4] : memref<1x8xf32, #tpu.memory_space<smem>>
      memref.store %cst_36, %arg6[%c0_37, %c4] : memref<1x8xf32, #tpu.memory_space<smem>>
      %cst_38 = arith.constant 0.000000e+00 : f32
      %c0_39 = arith.constant 0 : index
      %c5 = arith.constant 5 : index
      %75 = memref.load %arg6[%c0_39, %c5] : memref<1x8xf32, #tpu.memory_space<smem>>
      memref.store %cst_38, %arg6[%c0_39, %c5] : memref<1x8xf32, #tpu.memory_space<smem>>
      %cst_40 = arith.constant 0.000000e+00 : f32
      %c0_41 = arith.constant 0 : index
      %c6 = arith.constant 6 : index
      %76 = memref.load %arg6[%c0_41, %c6] : memref<1x8xf32, #tpu.memory_space<smem>>
      memref.store %cst_40, %arg6[%c0_41, %c6] : memref<1x8xf32, #tpu.memory_space<smem>>
      %cst_42 = arith.constant 0.000000e+00 : f32
      %c0_43 = arith.constant 0 : index
      %c7 = arith.constant 7 : index
      %77 = memref.load %arg6[%c0_43, %c7] : memref<1x8xf32, #tpu.memory_space<smem>>
      memref.store %cst_42, %arg6[%c0_43, %c7] : memref<1x8xf32, #tpu.memory_space<smem>>
    } else {
    }
    return
  }
  func.func @transform_0(%arg0: i32, %arg1: i32) -> (i32, i32) {
    %c1_i32 = arith.constant 1 : i32
    %0 = arith.muli %arg0, %c1_i32 : i32
    %1 = arith.addi %0, %arg1 : i32
    %c0_i32 = arith.constant 0 : i32
    %2 = arith.minsi %1, %c0_i32 : i32
    %c0_i32_0 = arith.constant 0 : i32
    %c0_i32_1 = arith.constant 0 : i32
    return %2, %c0_i32_0 : i32, i32
  }
  func.func @transform_1(%arg0: i32, %arg1: i32) -> (i32, i32) {
    %c1_i32 = arith.constant 1 : i32
    %0 = arith.muli %arg0, %c1_i32 : i32
    %1 = arith.addi %0, %arg1 : i32
    %c0_i32 = arith.constant 0 : i32
    %2 = arith.minsi %1, %c0_i32 : i32
    %c0_i32_0 = arith.constant 0 : i32
    %c0_i32_1 = arith.constant 0 : i32
    return %2, %c0_i32_0 : i32, i32
  }
  func.func @transform_2(%arg0: i32, %arg1: i32) -> (i32, i32) {
    %c1_i32 = arith.constant 1 : i32
    %0 = arith.muli %arg0, %c1_i32 : i32
    %1 = arith.addi %0, %arg1 : i32
    %c0_i32 = arith.constant 0 : i32
    %2 = arith.minsi %1, %c0_i32 : i32
    %c0_i32_0 = arith.constant 0 : i32
    %c0_i32_1 = arith.constant 0 : i32
    return %2, %c0_i32_0 : i32, i32
  }
  func.func @transform_3(%arg0: i32, %arg1: i32) -> (i32, i32) {
    %c0_i32 = arith.constant 0 : i32
    %c0_i32_0 = arith.constant 0 : i32
    %c0_i32_1 = arith.constant 0 : i32
    return %c0_i32, %c0_i32_0 : i32, i32
  }
  func.func @transform_4(%arg0: i32, %arg1: i32) -> (i32, i32) {
    %c0_i32 = arith.constant 0 : i32
    %c0_i32_0 = arith.constant 0 : i32
    return %arg0, %c0_i32 : i32, i32
  }
}

</mosaic_0001>

<llo_original>
// kernel: tpu_custom_call.1
$region0: #{tpu_custom_call.1}
  #allocation0 [shape = 'u32[]', space=smem, size = 0x4, offset = 0x4, fixed_abs, tag = 'smem constant byte address 0x4 - core index']
  #allocation1 [shape = 'u32[144,128]{1,0:T(1,128)}', space=vmem, size = 0x12000, scoped, tag = 'internal scratch']
  #allocation2 [shape = 'f32[32,64]{1,0:T(8,128)}', space=vmem, size = 0x4000, scoped, tag = 'scratch operand']
  #allocation3 [shape = 'f32[32,64]{1,0:T(8,128)}', space=vmem, size = 0x4000, scoped, tag = 'scratch operand']
  %s0 = inlined_call_operand.vmem [shape: f32[32,128], index: 0, kind: input, shape index: {}]
  %s1 = inlined_call_operand.vmem [shape: f32[32,128], index: 1, kind: input, shape index: {}]
  %s2 = inlined_call_operand.vmem [shape: s8[32,64], index: 2, kind: input, shape index: {}]
  %s3 = inlined_call_operand.vmem [shape: f32[128,64], index: 3, kind: input, shape index: {}]
  %s4 = inlined_call_operand.hbm [shape: f32[1,8], index: 4, kind: output, shape index: {}]
  %s5 = sld [smem:[#allocation0]]
  $region42: #{tpu_custom_call.1} parent=0
    _
  %s7 = ssub.s32 1, %s5
  %s8 = scalar_select 0, %s7, %s5
  $region1: #{tpu_custom_call.1} parent=0
    #allocation4 [shape = 'u8[512]{0}', space=smem, size = 0x200, scoped, tag = 'output window, operand 0, single buffered']
    #allocation5 [shape = 's32[1]{0}', space=sflag, size = 0x4, scoped, tag = 'scoped memory for tpu_custom_call.1']
    %9 = vsyncpa [#allocation5], 0
    // Predicated region
    $region2: #{tpu_custom_call.1} parent=1 // pred_check
      _
    $region3: #{tpu_custom_call.1} parent=1 // pred_check_branch
      %11 = sbr.rel (0) target = $region5
    $region4: #{tpu_custom_call.1} parent=1 // pred_region
      %s12 = sadd.s32 0, 0
      %p13 = scmp.lt.s32.totalorder %s12, 0
      %s14 = scalar_select %p13, %s12, 0
      %s15 = smul.u32 4, %s14
      %p16 = scmp.lt.s32.totalorder %s15, 3
      %s17 = scalar_select %p16, %s15, 3
      %s18 = smul.addr %s17, 8
      %s19 = scalar_lea.vmem %s0, %s18
      %s20 = sadd.s32 0, 0
      %p21 = scmp.lt.s32.totalorder %s20, 0
      %s22 = scalar_select %p21, %s20, 0
      %s23 = smul.u32 4, %s22
    $region5: #{tpu_custom_call.1} parent=1 // pred_fallthru
      _
    // Predicated region
    $region6: #{tpu_custom_call.1} parent=1 // pred_check
      _
    $region7: #{tpu_custom_call.1} parent=1 // pred_check_branch
      %25 = sbr.rel (0) target = $region9
    $region8: #{tpu_custom_call.1} parent=1 // pred_region
      %s26 = sadd.s32 0, 0
      %p27 = scmp.lt.s32.totalorder %s26, 0
      %s28 = scalar_select %p27, %s26, 0
      %s29 = smul.u32 4, %s28
      %p30 = scmp.lt.s32.totalorder %s29, 3
      %s31 = scalar_select %p30, %s29, 3
      %s32 = smul.addr %s31, 8
      %s33 = scalar_lea.vmem %s1, %s32
      %s34 = sadd.s32 0, 0
      %p35 = scmp.lt.s32.totalorder %s34, 0
      %s36 = scalar_select %p35, %s34, 0
      %s37 = smul.u32 4, %s36
    $region9: #{tpu_custom_call.1} parent=1 // pred_fallthru
      _
    // Predicated region
    $region10: #{tpu_custom_call.1} parent=1 // pred_check
      _
    $region11: #{tpu_custom_call.1} parent=1 // pred_check_branch
      %39 = sbr.rel (0) target = $region13
    $region12: #{tpu_custom_call.1} parent=1 // pred_region
      %s40 = sadd.s32 0, 0
      %p41 = scmp.lt.s32.totalorder %s40, 0
      %s42 = scalar_select %p41, %s40, 0
      %p43 = scmp.lt.s32.totalorder %s42, 0
      %s44 = scalar_select %p43, %s42, 0
      %s45 = smul.addr %s44, 8
      %s46 = scalar_lea.vmem %s2, %s45
      %s47 = sadd.s32 0, 0
      %p48 = scmp.lt.s32.totalorder %s47, 0
      %s49 = scalar_select %p48, %s47, 0
    $region13: #{tpu_custom_call.1} parent=1 // pred_fallthru
      _
    // Predicated region
    $region14: #{tpu_custom_call.1} parent=1 // pred_check
      _
    $region15: #{tpu_custom_call.1} parent=1 // pred_check_branch
      %51 = sbr.rel (0) target = $region17
    $region16: #{tpu_custom_call.1} parent=1 // pred_region
      _
    $region17: #{tpu_custom_call.1} parent=1 // pred_fallthru
      _
    %s52 = sadd.s32 0, 0
    %p53 = scmp.lt.s32.totalorder %s52, 0
    %s54 = scalar_select %p53, %s52, 0
    %s55 = smul.u32 4, %s54
    %p56 = scmp.lt.s32.totalorder %s55, 3
    %s57 = scalar_select %p56, %s55, 3
    %s58 = smul.addr %s57, 8
    %s59 = scalar_lea.vmem %s0, %s58
    %s60 = sadd.s32 0, 0
    %p61 = scmp.lt.s32.totalorder %s60, 0
    %s62 = scalar_select %p61, %s60, 0
    %s63 = smul.u32 4, %s62
    %p64 = scmp.lt.s32.totalorder %s63, 3
    %s65 = scalar_select %p64, %s63, 3
    %s66 = smul.addr %s65, 8
    %s67 = scalar_lea.vmem %s1, %s66
    %s68 = sadd.s32 0, 0
    %p69 = scmp.lt.s32.totalorder %s68, 0
    %s70 = scalar_select %p69, %s68, 0
    %p71 = scmp.lt.s32.totalorder %s70, 0
    %s72 = scalar_select %p71, %s70, 0
    %s73 = smul.addr %s72, 8
    %s74 = scalar_lea.vmem %s2, %s73
    %s75 = sadd.s32 0, 0
    %p76 = scmp.lt.s32.totalorder %s75, 0
    %s77 = scalar_select %p76, %s75, 0
    %s78 = smul.u32 4, %s77
    %p79 = scmp.lt.s32.totalorder %s78, 3
    %s80 = scalar_select %p79, %s78, 3
    %s81 = smul.addr %s80, 8
    %s82 = scalar_lea.vmem %s0, %s81
    %s83 = sadd.s32 0, 0
    %p84 = scmp.lt.s32.totalorder %s83, 0
    %s85 = scalar_select %p84, %s83, 0
    %s86 = smul.u32 4, %s85
    %s87 = sadd.s32 0, 0
    %p88 = scmp.lt.s32.totalorder %s87, 0
    %s89 = scalar_select %p88, %s87, 0
    %s90 = smul.u32 4, %s89
    %p91 = scmp.lt.s32.totalorder %s90, 3
    %s92 = scalar_select %p91, %s90, 3
    %s93 = smul.addr %s92, 8
    %s94 = scalar_lea.vmem %s1, %s93
    %s95 = sadd.s32 0, 0
    %p96 = scmp.lt.s32.totalorder %s95, 0
    %s97 = scalar_select %p96, %s95, 0
    %s98 = smul.u32 4, %s97
    %s99 = sadd.s32 0, 0
    %p100 = scmp.lt.s32.totalorder %s99, 0
    %s101 = scalar_select %p100, %s99, 0
    %p102 = scmp.lt.s32.totalorder %s101, 0
    %s103 = scalar_select %p102, %s101, 0
    %s104 = smul.addr %s103, 8
    %s105 = scalar_lea.vmem %s2, %s104
    %s106 = sadd.s32 0, 0
    %p107 = scmp.lt.s32.totalorder %s106, 0
    %s108 = scalar_select %p107, %s106, 0
    %p109 = scmp.eq.s32.totalorder 0, 0
    // Predicated region
    $region18: #{tpu_custom_call.1} parent=1 // pred_check
      %p110 = pneg %p109
    $region19: #{tpu_custom_call.1} parent=1 // pred_check_branch
      %112 = sbr.rel (%p110) target = $region21
    $region20: #{tpu_custom_call.1} parent=1 // pred_region
      %vm113 = vcmask 523264
      %114 = vst.msk [vmem:[#allocation2] sm:$0xff] %vm113, 0.0
      %115 = vst.msk [vmem:[#allocation2 + $0x8] sm:$0xff] %vm113, 0.0
      %116 = vst.msk [vmem:[#allocation2 + $0x10] sm:$0xff] %vm113, 0.0
      %117 = vst.msk [vmem:[#allocation2 + $0x18] sm:$0xff] %vm113, 0.0
      %118 = vst.msk [vmem:[#allocation3] sm:$0xff] %vm113, 0.0
      %119 = vst.msk [vmem:[#allocation3 + $0x8] sm:$0xff] %vm113, 0.0
      %120 = vst.msk [vmem:[#allocation3 + $0x10] sm:$0xff] %vm113, 0.0
      %121 = vst.msk [vmem:[#allocation3 + $0x18] sm:$0xff] %vm113, 0.0
    $region21: #{tpu_custom_call.1} parent=1 // pred_fallthru
      _
    %v122 = vld [vmem:[%s82] sm:$0xff]
    %v123 = vld [vmem:[%s82 + $0x8] sm:$0xff]
    %v124 = vld [vmem:[%s82 + $0x10] sm:$0xff]
    %v125 = vld [vmem:[%s82 + $0x18] sm:$0xff]
    %v126 = vld [vmem:[%s94] sm:$0xff]
    %v127 = vld [vmem:[%s94 + $0x8] sm:$0xff]
    %v128 = vld [vmem:[%s94 + $0x10] sm:$0xff]
    %v129 = vld [vmem:[%s94 + $0x18] sm:$0xff]
    %v130 = vsub.f32 %v122, %v126
    %v131 = vsub.f32 %v123, %v127
    %v132 = vsub.f32 %v124, %v128
    %v133 = vsub.f32 %v125, %v129
    %v134 = vld [vmem:[%s105] sm:$0xff]
    %v135 = vunpack.c.0.s8 %v134
    %v136 = vunpack.c.1.s8 %v134
    %v137 = vunpack.c.2.s8 %v134
    %v138 = vunpack.c.3.s8 %v134
    %v139 = vcvt.s32.f32 %v135
    %v140 = vcvt.s32.f32 %v136
    %v141 = vcvt.s32.f32 %v137
    %v142 = vcvt.s32.f32 %v138
    %v143 = vmul.f32 %v130, %v130
    %v144 = vmul.f32 %v131, %v131
    %v145 = vmul.f32 %v132, %v132
    %v146 = vmul.f32 %v133, %v133
    %v147 = vld [vmem:[%s3] sm:$0xff]
    %v148 = vld [vmem:[%s3 + $0x8] sm:$0xff]
    %v149 = vld [vmem:[%s3 + $0x10] sm:$0xff]
    %v150 = vld [vmem:[%s3 + $0x18] sm:$0xff]
    %v151 = vld [vmem:[%s3 + $0x20] sm:$0xff]
    %v152 = vld [vmem:[%s3 + $0x28] sm:$0xff]
    %v153 = vld [vmem:[%s3 + $0x30] sm:$0xff]
    %v154 = vld [vmem:[%s3 + $0x38] sm:$0xff]
    %v155 = vld [vmem:[%s3 + $0x40] sm:$0xff]
    %v156 = vld [vmem:[%s3 + $0x48] sm:$0xff]
    %v157 = vld [vmem:[%s3 + $0x50] sm:$0xff]
    %v158 = vld [vmem:[%s3 + $0x58] sm:$0xff]
    %v159 = vld [vmem:[%s3 + $0x60] sm:$0xff]
    %v160 = vld [vmem:[%s3 + $0x68] sm:$0xff]
    %v161 = vld [vmem:[%s3 + $0x70] sm:$0xff]
    %v162 = vld [vmem:[%s3 + $0x78] sm:$0xff]
    %163 = vmatprep.subr.mxu0 0.0
    %v164 = vand.u32 %v147, 4294901760
    %165 = vmatpush1.msra.mxu0 %v164
    %166 = vmatprep.subr.mxu0 0.0
    %v167 = vand.u32 %v148, 4294901760
    %168 = vmatpush1.msra.mxu0 %v167
    %169 = vmatprep.subr.mxu0 0.0
    %v170 = vand.u32 %v149, 4294901760
    %171 = vmatpush1.msra.mxu0 %v170
    %172 = vmatprep.subr.mxu0 0.0
    %v173 = vand.u32 %v150, 4294901760
    %174 = vmatpush1.msra.mxu0 %v173
    %175 = vmatprep.subr.mxu0 0.0
    %v176 = vand.u32 %v151, 4294901760
    %177 = vmatpush1.msra.mxu0 %v176
    %178 = vmatprep.subr.mxu0 0.0
    %v179 = vand.u32 %v152, 4294901760
    %180 = vmatpush1.msra.mxu0 %v179
    %181 = vmatprep.subr.mxu0 0.0
    %v182 = vand.u32 %v153, 4294901760
    %183 = vmatpush1.msra.mxu0 %v182
    %184 = vmatprep.subr.mxu0 0.0
    %v185 = vand.u32 %v154, 4294901760
    %186 = vmatpush1.msra.mxu0 %v185
    %187 = vmatprep.subr.mxu0 0.0
    %v188 = vand.u32 %v155, 4294901760
    %189 = vmatpush1.msra.mxu0 %v188
    %190 = vmatprep.subr.mxu0 0.0
    %v191 = vand.u32 %v156, 4294901760
    %192 = vmatpush1.msra.mxu0 %v191
    %193 = vmatprep.subr.mxu0 0.0
    %v194 = vand.u32 %v157, 4294901760
    %195 = vmatpush1.msra.mxu0 %v194
    %196 = vmatprep.subr.mxu0 0.0
    %v197 = vand.u32 %v158, 4294901760
    %198 = vmatpush1.msra.mxu0 %v197
    %199 = vmatprep.subr.mxu0 0.0
    %v200 = vand.u32 %v159, 4294901760
    %201 = vmatpush1.msra.mxu0 %v200
    %202 = vmatprep.subr.mxu0 0.0
    %v203 = vand.u32 %v160, 4294901760
    %204 = vmatpush1.msra.mxu0 %v203
    %205 = vmatprep.subr.mxu0 0.0
    %v206 = vand.u32 %v161, 4294901760
    %207 = vmatpush1.msra.mxu0 %v206
    %208 = vmatprep.subr.mxu0 0.0
    %v209 = vand.u32 %v162, 4294901760
    %210 = vmatpush1.msra.mxu0 %v209
    %211 = vmatprep.subr.mxu0 0.0
    %212 = vmatpush1.msra.mxu0 0.0
    %213 = vmatprep.subr.mxu0 0.0
    %214 = vmatpush1.msra.mxu0 0.0
    %215 = vmatprep.subr.mxu0 0.0
    %216 = vmatpush1.msra.mxu0 0.0
    %217 = vmatprep.subr.mxu0 0.0
    %218 = vmatpush1.msra.mxu0 0.0
    %219 = vmatprep.subr.mxu0 0.0
    %220 = vmatpush1.msra.mxu0 0.0
    %221 = vmatprep.subr.mxu0 0.0
    %222 = vmatpush1.msra.mxu0 0.0
    %223 = vmatprep.subr.mxu0 0.0
    %224 = vmatpush1.msra.mxu0 0.0
    %225 = vmatprep.subr.mxu0 0.0
    %226 = vmatpush1.msra.mxu0 0.0
    %227 = vmatprep.subr.mxu0 0.0
    %228 = vmatpush1.msra.mxu0 0.0
    %229 = vmatprep.subr.mxu0 0.0
    %230 = vmatpush1.msra.mxu0 0.0
    %231 = vmatprep.subr.mxu0 0.0
    %232 = vmatpush1.msra.mxu0 0.0
    %233 = vmatprep.subr.mxu0 0.0
    %234 = vmatpush1.msra.mxu0 0.0
    %235 = vmatprep.subr.mxu0 0.0
    %236 = vmatpush1.msra.mxu0 0.0
    %237 = vmatprep.subr.mxu0 0.0
    %238 = vmatpush1.msra.mxu0 0.0
    %239 = vmatprep.subr.mxu0 0.0
    %240 = vmatpush1.msra.mxu0 0.0
    %241 = vmatprep.subr.mxu0 0.0
    %242 = vmatpush1.msra.mxu0 0.0
    %243 = vmatprep.mubr.f32.mxu0 0.0
    %v244 = vand.u32 %v143, 4294901760
    %v245 = vsub.f32 %v143, %v244
    %v246 = vand.u32 %v245, 4294901760
    %v247 = vsub.f32 %v245, %v246
    %v248 = vand.u32 %v247, 4294901760
    %249 = vmatmul.mubr.f32.gmra.mrb[0].mxu0 %v248
    %v250 = vpop.f32.mrb[0].mxu0
    %v251 = vadd.f32 0.0, %v250
    %v252 = vpop.f32.mrb[0].mxu0
    %253 = vmatprep.mubr.f32.mxu0 0.0
    %v254 = vand.u32 %v144, 4294901760
    %v255 = vsub.f32 %v144, %v254
    %v256 = vand.u32 %v255, 4294901760
    %v257 = vsub.f32 %v255, %v256
    %v258 = vand.u32 %v257, 4294901760
    %259 = vmatmul.mubr.f32.gmra.mrb[0].mxu0 %v258
    %v260 = vpop.f32.mrb[0].mxu0
    %v261 = vadd.f32 0.0, %v260
    %v262 = vpop.f32.mrb[0].mxu0
    %263 = vmatprep.mubr.f32.mxu0 0.0
    %v264 = vand.u32 %v145, 4294901760
    %v265 = vsub.f32 %v145, %v264
    %v266 = vand.u32 %v265, 4294901760
    %v267 = vsub.f32 %v265, %v266
    %v268 = vand.u32 %v267, 4294901760
    %269 = vmatmul.mubr.f32.gmra.mrb[0].mxu0 %v268
    %v270 = vpop.f32.mrb[0].mxu0
    %v271 = vadd.f32 0.0, %v270
    %v272 = vpop.f32.mrb[0].mxu0
    %273 = vmatprep.mubr.f32.mxu0 0.0
    %v274 = vand.u32 %v146, 4294901760
    %v275 = vsub.f32 %v146, %v274
    %v276 = vand.u32 %v275, 4294901760
    %v277 = vsub.f32 %v275, %v276
    %v278 = vand.u32 %v277, 4294901760
    %279 = vmatmul.mubr.f32.gmra.mrb[0].mxu0 %v278
    %v280 = vpop.f32.mrb[0].mxu0
    %v281 = vadd.f32 0.0, %v280
    %v282 = vpop.f32.mrb[0].mxu0
    %283 = vdwg.mxu0
    %284 = vmatprep.subr.mxu0 0.0
    %v285 = vand.u32 %v147, 4294901760
    %v286 = vsub.f32 %v147, %v285
    %v287 = vand.u32 %v286, 4294901760
    %v288 = vsub.f32 %v286, %v287
    %v289 = vand.u32 %v288, 4294901760
    %290 = vmatpush1.msra.mxu0 %v289
    %291 = vmatprep.subr.mxu0 0.0
    %v292 = vand.u32 %v148, 4294901760
    %v293 = vsub.f32 %v148, %v292
    %v294 = vand.u32 %v293, 4294901760
    %v295 = vsub.f32 %v293, %v294
    %v296 = vand.u32 %v295, 4294901760
    %297 = vmatpush1.msra.mxu0 %v296
    %298 = vmatprep.subr.mxu0 0.0
    %v299 = vand.u32 %v149, 4294901760
    %v300 = vsub.f32 %v149, %v299
    %v301 = vand.u32 %v300, 4294901760
    %v302 = vsub.f32 %v300, %v301
    %v303 = vand.u32 %v302, 4294901760
    %304 = vmatpush1.msra.mxu0 %v303
    %305 = vmatprep.subr.mxu0 0.0
    %v306 = vand.u32 %v150, 4294901760
    %v307 = vsub.f32 %v150, %v306
    %v308 = vand.u32 %v307, 4294901760
    %v309 = vsub.f32 %v307, %v308
    %v310 = vand.u32 %v309, 4294901760
    %311 = vmatpush1.msra.mxu0 %v310
    %312 = vmatprep.subr.mxu0 0.0
    %v313 = vand.u32 %v151, 4294901760
    %v314 = vsub.f32 %v151, %v313
    %v315 = vand.u32 %v314, 4294901760
    %v316 = vsub.f32 %v314, %v315
    %v317 = vand.u32 %v316, 4294901760
    %318 = vmatpush1.msra.mxu0 %v317
    %319 = vmatprep.subr.mxu0 0.0
    %v320 = vand.u32 %v152, 4294901760
    %v321 = vsub.f32 %v152, %v320
    %v322 = vand.u32 %v321, 4294901760
    %v323 = vsub.f32 %v321, %v322
    %v324 = vand.u32 %v323, 4294901760
    %325 = vmatpush1.msra.mxu0 %v324
    %326 = vmatprep.subr.mxu0 0.0
    %v327 = vand.u32 %v153, 4294901760
    %v328 = vsub.f32 %v153, %v327
    %v329 = vand.u32 %v328, 4294901760
    %v330 = vsub.f32 %v328, %v329
    %v331 = vand.u32 %v330, 4294901760
    %332 = vmatpush1.msra.mxu0 %v331
    %333 = vmatprep.subr.mxu0 0.0
    %v334 = vand.u32 %v154, 4294901760
    %v335 = vsub.f32 %v154, %v334
    %v336 = vand.u32 %v335, 4294901760
    %v337 = vsub.f32 %v335, %v336
    %v338 = vand.u32 %v337, 4294901760
    %339 = vmatpush1.msra.mxu0 %v338
    %340 = vmatprep.subr.mxu0 0.0
    %v341 = vand.u32 %v155, 4294901760
    %v342 = vsub.f32 %v155, %v341
    %v343 = vand.u32 %v342, 4294901760
    %v344 = vsub.f32 %v342, %v343
    %v345 = vand.u32 %v344, 4294901760
    %346 = vmatpush1.msra.mxu0 %v345
    %347 = vmatprep.subr.mxu0 0.0
    %v348 = vand.u32 %v156, 4294901760
    %v349 = vsub.f32 %v156, %v348
    %v350 = vand.u32 %v349, 4294901760
    %v351 = vsub.f32 %v349, %v350
    %v352 = vand.u32 %v351, 4294901760
    %353 = vmatpush1.msra.mxu0 %v352
    %354 = vmatprep.subr.mxu0 0.0
    %v355 = vand.u32 %v157, 4294901760
    %v356 = vsub.f32 %v157, %v355
    %v357 = vand.u32 %v356, 4294901760
    %v358 = vsub.f32 %v356, %v357
    %v359 = vand.u32 %v358, 4294901760
    %360 = vmatpush1.msra.mxu0 %v359
    %361 = vmatprep.subr.mxu0 0.0
    %v362 = vand.u32 %v158, 4294901760
    %v363 = vsub.f32 %v158, %v362
    %v364 = vand.u32 %v363, 4294901760
    %v365 = vsub.f32 %v363, %v364
    %v366 = vand.u32 %v365, 4294901760
    %367 = vmatpush1.msra.mxu0 %v366
    %368 = vmatprep.subr.mxu0 0.0
    %v369 = vand.u32 %v159, 4294901760
    %v370 = vsub.f32 %v159, %v369
    %v371 = vand.u32 %v370, 4294901760
    %v372 = vsub.f32 %v370, %v371
    %v373 = vand.u32 %v372, 4294901760
    %374 = vmatpush1.msra.mxu0 %v373
    %375 = vmatprep.subr.mxu0 0.0
    %v376 = vand.u32 %v160, 4294901760
    %v377 = vsub.f32 %v160, %v376
    %v378 = vand.u32 %v377, 4294901760
    %v379 = vsub.f32 %v377, %v378
    %v380 = vand.u32 %v379, 4294901760
    %381 = vmatpush1.msra.mxu0 %v380
    %382 = vmatprep.subr.mxu0 0.0
    %v383 = vand.u32 %v161, 4294901760
    %v384 = vsub.f32 %v161, %v383
    %v385 = vand.u32 %v384, 4294901760
    %v386 = vsub.f32 %v384, %v385
    %v387 = vand.u32 %v386, 4294901760
    %388 = vmatpush1.msra.mxu0 %v387
    %389 = vmatprep.subr.mxu0 0.0
    %v390 = vand.u32 %v162, 4294901760
    %v391 = vsub.f32 %v162, %v390
    %v392 = vand.u32 %v391, 4294901760
    %v393 = vsub.f32 %v391, %v392
    %v394 = vand.u32 %v393, 4294901760
    %395 = vmatpush1.msra.mxu0 %v394
    %396 = vmatprep.subr.mxu0 0.0
    %397 = vmatpush1.msra.mxu0 0.0
    %398 = vmatprep.subr.mxu0 0.0
    %399 = vmatpush1.msra.mxu0 0.0
    %400 = vmatprep.subr.mxu0 0.0
    %401 = vmatpush1.msra.mxu0 0.0
    %402 = vmatprep.subr.mxu0 0.0
    %403 = vmatpush1.msra.mxu0 0.0
    %404 = vmatprep.subr.mxu0 0.0
    %405 = vmatpush1.msra.mxu0 0.0
    %406 = vmatprep.subr.mxu0 0.0
    %407 = vmatpush1.msra.mxu0 0.0
    %408 = vmatprep.subr.mxu0 0.0
    %409 = vmatpush1.msra.mxu0 0.0
    %410 = vmatprep.subr.mxu0 0.0
    %411 = vmatpush1.msra.mxu0 0.0
    %412 = vmatprep.subr.mxu0 0.0
    %413 = vmatpush1.msra.mxu0 0.0
    %414 = vmatprep.subr.mxu0 0.0
    %415 = vmatpush1.msra.mxu0 0.0
    %416 = vmatprep.subr.mxu0 0.0
    %417 = vmatpush1.msra.mxu0 0.0
    %418 = vmatprep.subr.mxu0 0.0
    %419 = vmatpush1.msra.mxu0 0.0
    %420 = vmatprep.subr.mxu0 0.0
    %421 = vmatpush1.msra.mxu0 0.0
    %422 = vmatprep.subr.mxu0 0.0
    %423 = vmatpush1.msra.mxu0 0.0
    %424 = vmatprep.subr.mxu0 0.0
    %425 = vmatpush1.msra.mxu0 0.0
    %426 = vmatprep.subr.mxu0 0.0
    %427 = vmatpush1.msra.mxu0 0.0
    %428 = vmatprep.mubr.f32.mxu0 0.0
    %v429 = vand.u32 %v143, 4294901760
    %430 = vmatmul.mubr.f32.gmra.mrb[0].mxu0 %v429
    %v431 = vpop.f32.mrb[0].mxu0
    %v432 = vadd.f32 %v251, %v431
    %v433 = vpop.f32.mrb[0].mxu0
    %434 = vmatprep.mubr.f32.mxu0 0.0
    %v435 = vand.u32 %v144, 4294901760
    %436 = vmatmul.mubr.f32.gmra.mrb[0].mxu0 %v435
    %v437 = vpop.f32.mrb[0].mxu0
    %v438 = vadd.f32 %v261, %v437
    %v439 = vpop.f32.mrb[0].mxu0
    %440 = vmatprep.mubr.f32.mxu0 0.0
    %v441 = vand.u32 %v145, 4294901760
    %442 = vmatmul.mubr.f32.gmra.mrb[0].mxu0 %v441
    %v443 = vpop.f32.mrb[0].mxu0
    %v444 = vadd.f32 %v271, %v443
    %v445 = vpop.f32.mrb[0].mxu0
    %446 = vmatprep.mubr.f32.mxu0 0.0
    %v447 = vand.u32 %v146, 4294901760
    %448 = vmatmul.mubr.f32.gmra.mrb[0].mxu0 %v447
    %v449 = vpop.f32.mrb[0].mxu0
    %v450 = vadd.f32 %v281, %v449
    %v451 = vpop.f32.mrb[0].mxu0
    %452 = vdwg.mxu0
    %453 = vmatprep.subr.mxu0 0.0
    %v454 = vand.u32 %v147, 4294901760
    %v455 = vsub.f32 %v147, %v454
    %456 = vmatpush1.msra.mxu0 %v455
    %457 = vmatprep.subr.mxu0 0.0
    %v458 = vand.u32 %v148, 4294901760
    %v459 = vsub.f32 %v148, %v458
    %460 = vmatpush1.msra.mxu0 %v459
    %461 = vmatprep.subr.mxu0 0.0
    %v462 = vand.u32 %v149, 4294901760
    %v463 = vsub.f32 %v149, %v462
    %464 = vmatpush1.msra.mxu0 %v463
    %465 = vmatprep.subr.mxu0 0.0
    %v466 = vand.u32 %v150, 4294901760
    %v467 = vsub.f32 %v150, %v466
    %468 = vmatpush1.msra.mxu0 %v467
    %469 = vmatprep.subr.mxu0 0.0
    %v470 = vand.u32 %v151, 4294901760
    %v471 = vsub.f32 %v151, %v470
    %472 = vmatpush1.msra.mxu0 %v471
    %473 = vmatprep.subr.mxu0 0.0
    %v474 = vand.u32 %v152, 4294901760
    %v475 = vsub.f32 %v152, %v474
    %476 = vmatpush1.msra.mxu0 %v475
    %477 = vmatprep.subr.mxu0 0.0
    %v478 = vand.u32 %v153, 4294901760
    %v479 = vsub.f32 %v153, %v478
    %480 = vmatpush1.msra.mxu0 %v479
    %481 = vmatprep.subr.mxu0 0.0
    %v482 = vand.u32 %v154, 4294901760
    %v483 = vsub.f32 %v154, %v482
    %484 = vmatpush1.msra.mxu0 %v483
    %485 = vmatprep.subr.mxu0 0.0
    %v486 = vand.u32 %v155, 4294901760
    %v487 = vsub.f32 %v155, %v486
    %488 = vmatpush1.msra.mxu0 %v487
    %489 = vmatprep.subr.mxu0 0.0
    %v490 = vand.u32 %v156, 4294901760
    %v491 = vsub.f32 %v156, %v490
    %492 = vmatpush1.msra.mxu0 %v491
    %493 = vmatprep.subr.mxu0 0.0
    %v494 = vand.u32 %v157, 4294901760
    %v495 = vsub.f32 %v157, %v494
    %496 = vmatpush1.msra.mxu0 %v495
    %497 = vmatprep.subr.mxu0 0.0
    %v498 = vand.u32 %v158, 4294901760
    %v499 = vsub.f32 %v158, %v498
    %500 = vmatpush1.msra.mxu0 %v499
    %501 = vmatprep.subr.mxu0 0.0
    %v502 = vand.u32 %v159, 4294901760
    %v503 = vsub.f32 %v159, %v502
    %504 = vmatpush1.msra.mxu0 %v503
    %505 = vmatprep.subr.mxu0 0.0
    %v506 = vand.u32 %v160, 4294901760
    %v507 = vsub.f32 %v160, %v506
    %508 = vmatpush1.msra.mxu0 %v507
    %509 = vmatprep.subr.mxu0 0.0
    %v510 = vand.u32 %v161, 4294901760
    %v511 = vsub.f32 %v161, %v510
    %512 = vmatpush1.msra.mxu0 %v511
    %513 = vmatprep.subr.mxu0 0.0
    %v514 = vand.u32 %v162, 4294901760
    %v515 = vsub.f32 %v162, %v514
    %516 = vmatpush1.msra.mxu0 %v515
    %517 = vmatprep.subr.mxu0 0.0
    %518 = vmatpush1.msra.mxu0 0.0
    %519 = vmatprep.subr.mxu0 0.0
    %520 = vmatpush1.msra.mxu0 0.0
    %521 = vmatprep.subr.mxu0 0.0
    %522 = vmatpush1.msra.mxu0 0.0
    %523 = vmatprep.subr.mxu0 0.0
    %524 = vmatpush1.msra.mxu0 0.0
    %525 = vmatprep.subr.mxu0 0.0
    %526 = vmatpush1.msra.mxu0 0.0
    %527 = vmatprep.subr.mxu0 0.0
    %528 = vmatpush1.msra.mxu0 0.0
    %529 = vmatprep.subr.mxu0 0.0
    %530 = vmatpush1.msra.mxu0 0.0
    %531 = vmatprep.subr.mxu0 0.0
    %532 = vmatpush1.msra.mxu0 0.0
    %533 = vmatprep.subr.mxu0 0.0
    %534 = vmatpush1.msra.mxu0 0.0
    %535 = vmatprep.subr.mxu0 0.0
    %536 = vmatpush1.msra.mxu0 0.0
    %537 = vmatprep.subr.mxu0 0.0
    %538 = vmatpush1.msra.mxu0 0.0
    %539 = vmatprep.subr.mxu0 0.0
    %540 = vmatpush1.msra.mxu0 0.0
    %541 = vmatprep.subr.mxu0 0.0
    %542 = vmatpush1.msra.mxu0 0.0
    %543 = vmatprep.subr.mxu0 0.0
    %544 = vmatpush1.msra.mxu0 0.0
    %545 = vmatprep.subr.mxu0 0.0
    %546 = vmatpush1.msra.mxu0 0.0
    %547 = vmatprep.subr.mxu0 0.0
    %548 = vmatpush1.msra.mxu0 0.0
    %549 = vmatprep.mubr.f32.mxu0 0.0
    %v550 = vand.u32 %v143, 4294901760
    %v551 = vsub.f32 %v143, %v550
    %552 = vmatmul.mubr.f32.gmra.mrb[0].mxu0 %v551
    %v553 = vpop.f32.mrb[0].mxu0
    %v554 = vadd.f32 %v432, %v553
    %v555 = vpop.f32.mrb[0].mxu0
    %556 = vmatprep.mubr.f32.mxu0 0.0
    %v557 = vand.u32 %v144, 4294901760
    %v558 = vsub.f32 %v144, %v557
    %559 = vmatmul.mubr.f32.gmra.mrb[0].mxu0 %v558
    %v560 = vpop.f32.mrb[0].mxu0
    %v561 = vadd.f32 %v438, %v560
    %v562 = vpop.f32.mrb[0].mxu0
    %563 = vmatprep.mubr.f32.mxu0 0.0
    %v564 = vand.u32 %v145, 4294901760
    %v565 = vsub.f32 %v145, %v564
    %566 = vmatmul.mubr.f32.gmra.mrb[0].mxu0 %v565
    %v567 = vpop.f32.mrb[0].mxu0
    %v568 = vadd.f32 %v444, %v567
    %v569 = vpop.f32.mrb[0].mxu0
    %570 = vmatprep.mubr.f32.mxu0 0.0
    %v571 = vand.u32 %v146, 4294901760
    %v572 = vsub.f32 %v146, %v571
    %573 = vmatmul.mubr.f32.gmra.mrb[0].mxu0 %v572
    %v574 = vpop.f32.mrb[0].mxu0
    %v575 = vadd.f32 %v450, %v574
    %v576 = vpop.f32.mrb[0].mxu0
    %577 = vdwg.mxu0
    %578 = vmatprep.subr.mxu0 0.0
    %v579 = vand.u32 %v147, 4294901760
    %580 = vmatpush1.msra.mxu0 %v579
    %581 = vmatprep.subr.mxu0 0.0
    %v582 = vand.u32 %v148, 4294901760
    %583 = vmatpush1.msra.mxu0 %v582
    %584 = vmatprep.subr.mxu0 0.0
    %v585 = vand.u32 %v149, 4294901760
    %586 = vmatpush1.msra.mxu0 %v585
    %587 = vmatprep.subr.mxu0 0.0
    %v588 = vand.u32 %v150, 4294901760
    %589 = vmatpush1.msra.mxu0 %v588
    %590 = vmatprep.subr.mxu0 0.0
    %v591 = vand.u32 %v151, 4294901760
    %592 = vmatpush1.msra.mxu0 %v591
    %593 = vmatprep.subr.mxu0 0.0
    %v594 = vand.u32 %v152, 4294901760
    %595 = vmatpush1.msra.mxu0 %v594
    %596 = vmatprep.subr.mxu0 0.0
    %v597 = vand.u32 %v153, 4294901760
    %598 = vmatpush1.msra.mxu0 %v597
    %599 = vmatprep.subr.mxu0 0.0
    %v600 = vand.u32 %v154, 4294901760
    %601 = vmatpush1.msra.mxu0 %v600
    %602 = vmatprep.subr.mxu0 0.0
    %v603 = vand.u32 %v155, 4294901760
    %604 = vmatpush1.msra.mxu0 %v603
    %605 = vmatprep.subr.mxu0 0.0
    %v606 = vand.u32 %v156, 4294901760
    %607 = vmatpush1.msra.mxu0 %v606
    %608 = vmatprep.subr.mxu0 0.0
    %v609 = vand.u32 %v157, 4294901760
    %610 = vmatpush1.msra.mxu0 %v609
    %611 = vmatprep.subr.mxu0 0.0
    %v612 = vand.u32 %v158, 4294901760
    %613 = vmatpush1.msra.mxu0 %v612
    %614 = vmatprep.subr.mxu0 0.0
    %v615 = vand.u32 %v159, 4294901760
    %616 = vmatpush1.msra.mxu0 %v615
    %617 = vmatprep.subr.mxu0 0.0
    %v618 = vand.u32 %v160, 4294901760
    %619 = vmatpush1.msra.mxu0 %v618
    %620 = vmatprep.subr.mxu0 0.0
    %v621 = vand.u32 %v161, 4294901760
    %622 = vmatpush1.msra.mxu0 %v621
    %623 = vmatprep.subr.mxu0 0.0
    %v624 = vand.u32 %v162, 4294901760
    %625 = vmatpush1.msra.mxu0 %v624
    %626 = vmatprep.subr.mxu0 0.0
    %627 = vmatpush1.msra.mxu0 0.0
    %628 = vmatprep.subr.mxu0 0.0
    %629 = vmatpush1.msra.mxu0 0.0
    %630 = vmatprep.subr.mxu0 0.0
    %631 = vmatpush1.msra.mxu0 0.0
    %632 = vmatprep.subr.mxu0 0.0
    %633 = vmatpush1.msra.mxu0 0.0
    %634 = vmatprep.subr.mxu0 0.0
    %635 = vmatpush1.msra.mxu0 0.0
    %636 = vmatprep.subr.mxu0 0.0
    %637 = vmatpush1.msra.mxu0 0.0
    %638 = vmatprep.subr.mxu0 0.0
    %639 = vmatpush1.msra.mxu0 0.0
    %640 = vmatprep.subr.mxu0 0.0
    %641 = vmatpush1.msra.mxu0 0.0
    %642 = vmatprep.subr.mxu0 0.0
    %643 = vmatpush1.msra.mxu0 0.0
    %644 = vmatprep.subr.mxu0 0.0
    %645 = vmatpush1.msra.mxu0 0.0
    %646 = vmatprep.subr.mxu0 0.0
    %647 = vmatpush1.msra.mxu0 0.0
    %648 = vmatprep.subr.mxu0 0.0
    %649 = vmatpush1.msra.mxu0 0.0
    %650 = vmatprep.subr.mxu0 0.0
    %651 = vmatpush1.msra.mxu0 0.0
    %652 = vmatprep.subr.mxu0 0.0
    %653 = vmatpush1.msra.mxu0 0.0
    %654 = vmatprep.subr.mxu0 0.0
    %655 = vmatpush1.msra.mxu0 0.0
    %656 = vmatprep.subr.mxu0 0.0
    %657 = vmatpush1.msra.mxu0 0.0
    %658 = vmatprep.mubr.f32.mxu0 0.0
    %v659 = vand.u32 %v143, 4294901760
    %v660 = vsub.f32 %v143, %v659
    %v661 = vand.u32 %v660, 4294901760
    %662 = vmatmul.mubr.f32.gmra.mrb[0].mxu0 %v661
    %v663 = vpop.f32.mrb[0].mxu0
    %v664 = vadd.f32 %v554, %v663
    %v665 = vpop.f32.mrb[0].mxu0
    %666 = vmatprep.mubr.f32.mxu0 0.0
    %v667 = vand.u32 %v144, 4294901760
    %v668 = vsub.f32 %v144, %v667
    %v669 = vand.u32 %v668, 4294901760
    %670 = vmatmul.mubr.f32.gmra.mrb[0].mxu0 %v669
    %v671 = vpop.f32.mrb[0].mxu0
    %v672 = vadd.f32 %v561, %v671
    %v673 = vpop.f32.mrb[0].mxu0
    %674 = vmatprep.mubr.f32.mxu0 0.0
    %v675 = vand.u32 %v145, 4294901760
    %v676 = vsub.f32 %v145, %v675
    %v677 = vand.u32 %v676, 4294901760
    %678 = vmatmul.mubr.f32.gmra.mrb[0].mxu0 %v677
    %v679 = vpop.f32.mrb[0].mxu0
    %v680 = vadd.f32 %v568, %v679
    %v681 = vpop.f32.mrb[0].mxu0
    %682 = vmatprep.mubr.f32.mxu0 0.0
    %v683 = vand.u32 %v146, 4294901760
    %v684 = vsub.f32 %v146, %v683
    %v685 = vand.u32 %v684, 4294901760
    %686 = vmatmul.mubr.f32.gmra.mrb[0].mxu0 %v685
    %v687 = vpop.f32.mrb[0].mxu0
    %v688 = vadd.f32 %v575, %v687
    %v689 = vpop.f32.mrb[0].mxu0
    %690 = vdwg.mxu0
    %691 = vmatprep.subr.mxu0 0.0
    %v692 = vand.u32 %v147, 4294901760
    %v693 = vsub.f32 %v147, %v692
    %v694 = vand.u32 %v693, 4294901760
    %695 = vmatpush1.msra.mxu0 %v694
    %696 = vmatprep.subr.mxu0 0.0
    %v697 = vand.u32 %v148, 4294901760
    %v698 = vsub.f32 %v148, %v697
    %v699 = vand.u32 %v698, 4294901760
    %700 = vmatpush1.msra.mxu0 %v699
    %701 = vmatprep.subr.mxu0 0.0
    %v702 = vand.u32 %v149, 4294901760
    %v703 = vsub.f32 %v149, %v702
    %v704 = vand.u32 %v703, 4294901760
    %705 = vmatpush1.msra.mxu0 %v704
    %706 = vmatprep.subr.mxu0 0.0
    %v707 = vand.u32 %v150, 4294901760
    %v708 = vsub.f32 %v150, %v707
    %v709 = vand.u32 %v708, 4294901760
    %710 = vmatpush1.msra.mxu0 %v709
    %711 = vmatprep.subr.mxu0 0.0
    %v712 = vand.u32 %v151, 4294901760
    %v713 = vsub.f32 %v151, %v712
    %v714 = vand.u32 %v713, 4294901760
    %715 = vmatpush1.msra.mxu0 %v714
    %716 = vmatprep.subr.mxu0 0.0
    %v717 = vand.u32 %v152, 4294901760
    %v718 = vsub.f32 %v152, %v717
    %v719 = vand.u32 %v718, 4294901760
    %720 = vmatpush1.msra.mxu0 %v719
    %721 = vmatprep.subr.mxu0 0.0
    %v722 = vand.u32 %v153, 4294901760
    %v723 = vsub.f32 %v153, %v722
    %v724 = vand.u32 %v723, 4294901760
    %725 = vmatpush1.msra.mxu0 %v724
    %726 = vmatprep.subr.mxu0 0.0
    %v727 = vand.u32 %v154, 4294901760
    %v728 = vsub.f32 %v154, %v727
    %v729 = vand.u32 %v728, 4294901760
    %730 = vmatpush1.msra.mxu0 %v729
    %731 = vmatprep.subr.mxu0 0.0
    %v732 = vand.u32 %v155, 4294901760
    %v733 = vsub.f32 %v155, %v732
    %v734 = vand.u32 %v733, 4294901760
    %735 = vmatpush1.msra.mxu0 %v734
    %736 = vmatprep.subr.mxu0 0.0
    %v737 = vand.u32 %v156, 4294901760
    %v738 = vsub.f32 %v156, %v737
    %v739 = vand.u32 %v738, 4294901760
    %740 = vmatpush1.msra.mxu0 %v739
    %741 = vmatprep.subr.mxu0 0.0
    %v742 = vand.u32 %v157, 4294901760
    %v743 = vsub.f32 %v157, %v742
    %v744 = vand.u32 %v743, 4294901760
    %745 = vmatpush1.msra.mxu0 %v744
    %746 = vmatprep.subr.mxu0 0.0
    %v747 = vand.u32 %v158, 4294901760
    %v748 = vsub.f32 %v158, %v747
    %v749 = vand.u32 %v748, 4294901760
    %750 = vmatpush1.msra.mxu0 %v749
    %751 = vmatprep.subr.mxu0 0.0
    %v752 = vand.u32 %v159, 4294901760
    %v753 = vsub.f32 %v159, %v752
    %v754 = vand.u32 %v753, 4294901760
    %755 = vmatpush1.msra.mxu0 %v754
    %756 = vmatprep.subr.mxu0 0.0
    %v757 = vand.u32 %v160, 4294901760
    %v758 = vsub.f32 %v160, %v757
    %v759 = vand.u32 %v758, 4294901760
    %760 = vmatpush1.msra.mxu0 %v759
    %761 = vmatprep.subr.mxu0 0.0
    %v762 = vand.u32 %v161, 4294901760
    %v763 = vsub.f32 %v161, %v762
    %v764 = vand.u32 %v763, 4294901760
    %765 = vmatpush1.msra.mxu0 %v764
    %766 = vmatprep.subr.mxu0 0.0
    %v767 = vand.u32 %v162, 4294901760
    %v768 = vsub.f32 %v162, %v767
    %v769 = vand.u32 %v768, 4294901760
    %770 = vmatpush1.msra.mxu0 %v769
    %771 = vmatprep.subr.mxu0 0.0
    %772 = vmatpush1.msra.mxu0 0.0
    %773 = vmatprep.subr.mxu0 0.0
    %774 = vmatpush1.msra.mxu0 0.0
    %775 = vmatprep.subr.mxu0 0.0
    %776 = vmatpush1.msra.mxu0 0.0
    %777 = vmatprep.subr.mxu0 0.0
    %778 = vmatpush1.msra.mxu0 0.0
    %779 = vmatprep.subr.mxu0 0.0
    %780 = vmatpush1.msra.mxu0 0.0
    %781 = vmatprep.subr.mxu0 0.0
    %782 = vmatpush1.msra.mxu0 0.0
    %783 = vmatprep.subr.mxu0 0.0
    %784 = vmatpush1.msra.mxu0 0.0
    %785 = vmatprep.subr.mxu0 0.0
    %786 = vmatpush1.msra.mxu0 0.0
    %787 = vmatprep.subr.mxu0 0.0
    %788 = vmatpush1.msra.mxu0 0.0
    %789 = vmatprep.subr.mxu0 0.0
    %790 = vmatpush1.msra.mxu0 0.0
    %791 = vmatprep.subr.mxu0 0.0
    %792 = vmatpush1.msra.mxu0 0.0
    %793 = vmatprep.subr.mxu0 0.0
    %794 = vmatpush1.msra.mxu0 0.0
    %795 = vmatprep.subr.mxu0 0.0
    %796 = vmatpush1.msra.mxu0 0.0
    %797 = vmatprep.subr.mxu0 0.0
    %798 = vmatpush1.msra.mxu0 0.0
    %799 = vmatprep.subr.mxu0 0.0
    %800 = vmatpush1.msra.mxu0 0.0
    %801 = vmatprep.subr.mxu0 0.0
    %802 = vmatpush1.msra.mxu0 0.0
    %803 = vmatprep.mubr.f32.mxu0 0.0
    %v804 = vand.u32 %v143, 4294901760
    %805 = vmatmul.mubr.f32.gmra.mrb[0].mxu0 %v804
    %v806 = vpop.f32.mrb[0].mxu0
    %v807 = vadd.f32 %v664, %v806
    %v808 = vpop.f32.mrb[0].mxu0
    %809 = vmatprep.mubr.f32.mxu0 0.0
    %v810 = vand.u32 %v144, 4294901760
    %811 = vmatmul.mubr.f32.gmra.mrb[0].mxu0 %v810
    %v812 = vpop.f32.mrb[0].mxu0
    %v813 = vadd.f32 %v672, %v812
    %v814 = vpop.f32.mrb[0].mxu0
    %815 = vmatprep.mubr.f32.mxu0 0.0
    %v816 = vand.u32 %v145, 4294901760
    %817 = vmatmul.mubr.f32.gmra.mrb[0].mxu0 %v816
    %v818 = vpop.f32.mrb[0].mxu0
    %v819 = vadd.f32 %v680, %v818
    %v820 = vpop.f32.mrb[0].mxu0
    %821 = vmatprep.mubr.f32.mxu0 0.0
    %v822 = vand.u32 %v146, 4294901760
    %823 = vmatmul.mubr.f32.gmra.mrb[0].mxu0 %v822
    %v824 = vpop.f32.mrb[0].mxu0
    %v825 = vadd.f32 %v688, %v824
    %v826 = vpop.f32.mrb[0].mxu0
    %827 = vdwg.mxu0
    %828 = vmatprep.subr.mxu0 0.0
    %v829 = vand.u32 %v147, 4294901760
    %830 = vmatpush1.msra.mxu0 %v829
    %831 = vmatprep.subr.mxu0 0.0
    %v832 = vand.u32 %v148, 4294901760
    %833 = vmatpush1.msra.mxu0 %v832
    %834 = vmatprep.subr.mxu0 0.0
    %v835 = vand.u32 %v149, 4294901760
    %836 = vmatpush1.msra.mxu0 %v835
    %837 = vmatprep.subr.mxu0 0.0
    %v838 = vand.u32 %v150, 4294901760
    %839 = vmatpush1.msra.mxu0 %v838
    %840 = vmatprep.subr.mxu0 0.0
    %v841 = vand.u32 %v151, 4294901760
    %842 = vmatpush1.msra.mxu0 %v841
    %843 = vmatprep.subr.mxu0 0.0
    %v844 = vand.u32 %v152, 4294901760
    %845 = vmatpush1.msra.mxu0 %v844
    %846 = vmatprep.subr.mxu0 0.0
    %v847 = vand.u32 %v153, 4294901760
    %848 = vmatpush1.msra.mxu0 %v847
    %849 = vmatprep.subr.mxu0 0.0
    %v850 = vand.u32 %v154, 4294901760
    %851 = vmatpush1.msra.mxu0 %v850
    %852 = vmatprep.subr.mxu0 0.0
    %v853 = vand.u32 %v155, 4294901760
    %854 = vmatpush1.msra.mxu0 %v853
    %855 = vmatprep.subr.mxu0 0.0
    %v856 = vand.u32 %v156, 4294901760
    %857 = vmatpush1.msra.mxu0 %v856
    %858 = vmatprep.subr.mxu0 0.0
    %v859 = vand.u32 %v157, 4294901760
    %860 = vmatpush1.msra.mxu0 %v859
    %861 = vmatprep.subr.mxu0 0.0
    %v862 = vand.u32 %v158, 4294901760
    %863 = vmatpush1.msra.mxu0 %v862
    %864 = vmatprep.subr.mxu0 0.0
    %v865 = vand.u32 %v159, 4294901760
    %866 = vmatpush1.msra.mxu0 %v865
    %867 = vmatprep.subr.mxu0 0.0
    %v868 = vand.u32 %v160, 4294901760
    %869 = vmatpush1.msra.mxu0 %v868
    %870 = vmatprep.subr.mxu0 0.0
    %v871 = vand.u32 %v161, 4294901760
    %872 = vmatpush1.msra.mxu0 %v871
    %873 = vmatprep.subr.mxu0 0.0
    %v874 = vand.u32 %v162, 4294901760
    %875 = vmatpush1.msra.mxu0 %v874
    %876 = vmatprep.subr.mxu0 0.0
    %877 = vmatpush1.msra.mxu0 0.0
    %878 = vmatprep.subr.mxu0 0.0
    %879 = vmatpush1.msra.mxu0 0.0
    %880 = vmatprep.subr.mxu0 0.0
    %881 = vmatpush1.msra.mxu0 0.0
    %882 = vmatprep.subr.mxu0 0.0
    %883 = vmatpush1.msra.mxu0 0.0
    %884 = vmatprep.subr.mxu0 0.0
    %885 = vmatpush1.msra.mxu0 0.0
    %886 = vmatprep.subr.mxu0 0.0
    %887 = vmatpush1.msra.mxu0 0.0
    %888 = vmatprep.subr.mxu0 0.0
    %889 = vmatpush1.msra.mxu0 0.0
    %890 = vmatprep.subr.mxu0 0.0
    %891 = vmatpush1.msra.mxu0 0.0
    %892 = vmatprep.subr.mxu0 0.0
    %893 = vmatpush1.msra.mxu0 0.0
    %894 = vmatprep.subr.mxu0 0.0
    %895 = vmatpush1.msra.mxu0 0.0
    %896 = vmatprep.subr.mxu0 0.0
    %897 = vmatpush1.msra.mxu0 0.0
    %898 = vmatprep.subr.mxu0 0.0
    %899 = vmatpush1.msra.mxu0 0.0
    %900 = vmatprep.subr.mxu0 0.0
    %901 = vmatpush1.msra.mxu0 0.0
    %902 = vmatprep.subr.mxu0 0.0
    %903 = vmatpush1.msra.mxu0 0.0
    %904 = vmatprep.subr.mxu0 0.0
    %905 = vmatpush1.msra.mxu0 0.0
    %906 = vmatprep.subr.mxu0 0.0
    %907 = vmatpush1.msra.mxu0 0.0
    %908 = vmatprep.mubr.f32.mxu0 0.0
    %v909 = vand.u32 %v143, 4294901760
    %910 = vmatmul.mubr.f32.gmra.mrb[0].mxu0 %v909
    %v911 = vpop.f32.mrb[0].mxu0
    %v912 = vadd.f32 %v807, %v911
    %v913 = vpop.f32.mrb[0].mxu0
    %914 = vmatprep.mubr.f32.mxu0 0.0
    %v915 = vand.u32 %v144, 4294901760
    %916 = vmatmul.mubr.f32.gmra.mrb[0].mxu0 %v915
    %v917 = vpop.f32.mrb[0].mxu0
    %v918 = vadd.f32 %v813, %v917
    %v919 = vpop.f32.mrb[0].mxu0
    %920 = vmatprep.mubr.f32.mxu0 0.0
    %v921 = vand.u32 %v145, 4294901760
    %922 = vmatmul.mubr.f32.gmra.mrb[0].mxu0 %v921
    %v923 = vpop.f32.mrb[0].mxu0
    %v924 = vadd.f32 %v819, %v923
    %v925 = vpop.f32.mrb[0].mxu0
    %926 = vmatprep.mubr.f32.mxu0 0.0
    %v927 = vand.u32 %v146, 4294901760
    %928 = vmatmul.mubr.f32.gmra.mrb[0].mxu0 %v927
    %v929 = vpop.f32.mrb[0].mxu0
    %v930 = vadd.f32 %v825, %v929
    %v931 = vpop.f32.mrb[0].mxu0
    %932 = vdwg.mxu0
    %v933 = vrsqrt.pop %v912
    %v934 = vmul.f32 %v912, %v933
    %vm935 = vcmp.eq.f32.partialorder %v912, inf
    %v936 = vsel %vm935, %v912, %v934
    %vm937 = vcmp.eq.f32.partialorder %v912, 0.0
    %v938 = vand.u32 %v912, 2147483648
    %v939 = vsel %vm937, %v938, %v936
    %v940 = vrsqrt.pop %v918
    %v941 = vmul.f32 %v918, %v940
    %vm942 = vcmp.eq.f32.partialorder %v918, inf
    %v943 = vsel %vm942, %v918, %v941
    %vm944 = vcmp.eq.f32.partialorder %v918, 0.0
    %v945 = vand.u32 %v918, 2147483648
    %v946 = vsel %vm944, %v945, %v943
    %v947 = vrsqrt.pop %v924
    %v948 = vmul.f32 %v924, %v947
    %vm949 = vcmp.eq.f32.partialorder %v924, inf
    %v950 = vsel %vm949, %v924, %v948
    %vm951 = vcmp.eq.f32.partialorder %v924, 0.0
    %v952 = vand.u32 %v924, 2147483648
    %v953 = vsel %vm951, %v952, %v950
    %v954 = vrsqrt.pop %v930
    %v955 = vmul.f32 %v930, %v954
    %vm956 = vcmp.eq.f32.partialorder %v930, inf
    %v957 = vsel %vm956, %v930, %v955
    %vm958 = vcmp.eq.f32.partialorder %v930, 0.0
    %v959 = vand.u32 %v930, 2147483648
    %v960 = vsel %vm958, %v959, %v957
    %s961 = sadd.s32 0, 0
    %s962 = sadd.s32 %s961, 1
    %s963 = smul.u32 %s962, 32
    %p964 = scmp.le.s32.totalorder %s963, 32
    // Predicated region
    $region22: #{tpu_custom_call.1} parent=1 // pred_check
      %p965 = pneg %p964
    $region23: #{tpu_custom_call.1} parent=1 // pred_check_branch
      %967 = sbr.rel (%p965) target = $region25
    $region24: #{tpu_custom_call.1} parent=1 // pred_region
      %v968 = vld [vmem:[#allocation2] sm:$0xff]
      %v969 = vld [vmem:[#allocation2 + $0x8] sm:$0xff]
      %v970 = vld [vmem:[#allocation2 + $0x10] sm:$0xff]
      %v971 = vld [vmem:[#allocation2 + $0x18] sm:$0xff]
      %v972 = vmul.f32 %v939, %v139
      %v973 = vmul.f32 %v946, %v140
      %v974 = vmul.f32 %v953, %v141
      %v975 = vmul.f32 %v960, %v142
      %v976 = vadd.f32 %v968, %v972
      %v977 = vadd.f32 %v969, %v973
      %v978 = vadd.f32 %v970, %v974
      %v979 = vadd.f32 %v971, %v975
      %vm980 = vcmask 523264
      %981 = vst.msk [vmem:[#allocation2] sm:$0xff] %vm980, %v976
      %982 = vst.msk [vmem:[#allocation2 + $0x8] sm:$0xff] %vm980, %v977
      %983 = vst.msk [vmem:[#allocation2 + $0x10] sm:$0xff] %vm980, %v978
      %984 = vst.msk [vmem:[#allocation2 + $0x18] sm:$0xff] %vm980, %v979
      %v985 = vld [vmem:[#allocation3] sm:$0xff]
      %v986 = vld [vmem:[#allocation3 + $0x8] sm:$0xff]
      %v987 = vld [vmem:[#allocation3 + $0x10] sm:$0xff]
      %v988 = vld [vmem:[#allocation3 + $0x18] sm:$0xff]
      %v989 = vadd.f32 %v985, %v139
      %v990 = vadd.f32 %v986, %v140
      %v991 = vadd.f32 %v987, %v141
      %v992 = vadd.f32 %v988, %v142
      %993 = vst.msk [vmem:[#allocation3] sm:$0xff] %vm980, %v989
      %994 = vst.msk [vmem:[#allocation3 + $0x8] sm:$0xff] %vm980, %v990
      %995 = vst.msk [vmem:[#allocation3 + $0x10] sm:$0xff] %vm980, %v991
      %996 = vst.msk [vmem:[#allocation3 + $0x18] sm:$0xff] %vm980, %v992
    $region25: #{tpu_custom_call.1} parent=1 // pred_fallthru
      _
    %p997 = scmp.gt.s32.totalorder %s963, 32
    // Predicated region
    $region26: #{tpu_custom_call.1} parent=1 // pred_check
      %p998 = pneg %p997
    $region27: #{tpu_custom_call.1} parent=1 // pred_check_branch
      %1000 = sbr.rel (%p998) target = $region29
    $region28: #{tpu_custom_call.1} parent=1 // pred_region
      %s1001 = smul.u32 %s961, 32
      %v1002 = vlaneseq
      %v1003 = vshrl.u32 %v1002, 7
      %v1004 = vadd.s32 %v1003, 8
      %v1005 = vadd.s32 %v1003, 16
      %v1006 = vadd.s32 %v1003, 24
      %v1007 = vstv %s1001
      %v1008 = vadd.s32 %v1007, %v1003
      %v1009 = vadd.s32 %v1007, %v1004
      %v1010 = vadd.s32 %v1007, %v1005
      %v1011 = vadd.s32 %v1007, %v1006
      %vm1012 = vcmp.lt.s32.totalorder %v1008, 32
      %vm1013 = vcmp.lt.s32.totalorder %v1009, 32
      %vm1014 = vcmp.lt.s32.totalorder %v1010, 32
      %vm1015 = vcmp.lt.s32.totalorder %v1011, 32
      %v1016 = vsel %vm1012, %v139, 0.0
      %v1017 = vsel %vm1013, %v140, 0.0
      %v1018 = vsel %vm1014, %v141, 0.0
      %v1019 = vsel %vm1015, %v142, 0.0
      %v1020 = vld [vmem:[#allocation2] sm:$0xff]
      %v1021 = vld [vmem:[#allocation2 + $0x8] sm:$0xff]
      %v1022 = vld [vmem:[#allocation2 + $0x10] sm:$0xff]
      %v1023 = vld [vmem:[#allocation2 + $0x18] sm:$0xff]
      %v1024 = vsel %vm1012, %v939, 0.0
      %v1025 = vsel %vm1013, %v946, 0.0
      %v1026 = vsel %vm1014, %v953, 0.0
      %v1027 = vsel %vm1015, %v960, 0.0
      %v1028 = vmul.f32 %v1024, %v1016
      %v1029 = vmul.f32 %v1025, %v1017
      %v1030 = vmul.f32 %v1026, %v1018
      %v1031 = vmul.f32 %v1027, %v1019
      %v1032 = vadd.f32 %v1020, %v1028
      %v1033 = vadd.f32 %v1021, %v1029
      %v1034 = vadd.f32 %v1022, %v1030
      %v1035 = vadd.f32 %v1023, %v1031
      %vm1036 = vcmask 523264
      %1037 = vst.msk [vmem:[#allocation2] sm:$0xff] %vm1036, %v1032
      %1038 = vst.msk [vmem:[#allocation2 + $0x8] sm:$0xff] %vm1036, %v1033
      %1039 = vst.msk [vmem:[#allocation2 + $0x10] sm:$0xff] %vm1036, %v1034
      %1040 = vst.msk [vmem:[#allocation2 + $0x18] sm:$0xff] %vm1036, %v1035
      %v1041 = vld [vmem:[#allocation3] sm:$0xff]
      %v1042 = vld [vmem:[#allocation3 + $0x8] sm:$0xff]
      %v1043 = vld [vmem:[#allocation3 + $0x10] sm:$0xff]
      %v1044 = vld [vmem:[#allocation3 + $0x18] sm:$0xff]
      %v1045 = vadd.f32 %v1041, %v1016
      %v1046 = vadd.f32 %v1042, %v1017
      %v1047 = vadd.f32 %v1043, %v1018
      %v1048 = vadd.f32 %v1044, %v1019
      %1049 = vst.msk [vmem:[#allocation3] sm:$0xff] %vm1036, %v1045
      %1050 = vst.msk [vmem:[#allocation3 + $0x8] sm:$0xff] %vm1036, %v1046
      %1051 = vst.msk [vmem:[#allocation3 + $0x10] sm:$0xff] %vm1036, %v1047
      %1052 = vst.msk [vmem:[#allocation3 + $0x18] sm:$0xff] %vm1036, %v1048
    $region29: #{tpu_custom_call.1} parent=1 // pred_fallthru
      _
    // Predicated region
    $region30: #{tpu_custom_call.1} parent=1 // pred_check
      %p1053 = pneg %p109
    $region31: #{tpu_custom_call.1} parent=1 // pred_check_branch
      %1055 = sbr.rel (%p1053) target = $region33
    $region32: #{tpu_custom_call.1} parent=1 // pred_region
      %v1056 = vld [vmem:[#allocation2] sm:$0xff]
      %v1057 = vld [vmem:[#allocation2 + $0x8] sm:$0xff]
      %v1058 = vld [vmem:[#allocation2 + $0x10] sm:$0xff]
      %v1059 = vld [vmem:[#allocation2 + $0x18] sm:$0xff]
      %vm1060 = vcmask 523264
      %v1061 = vsel %vm1060, %v1056, 0.0
      %v1062 = vsel %vm1060, %v1057, 0.0
      %v1063 = vadd.f32 %v1061, %v1062
      %v1064 = vsel %vm1060, %v1058, 0.0
      %v1065 = vadd.f32 %v1063, %v1064
      %v1066 = vsel %vm1060, %v1059, 0.0
      %v1067 = vadd.f32 %v1065, %v1066
      %v1068 = vrot.slane %v1067, 4
      %v1069 = vadd.f32 %v1067, %v1068
      %v1070 = vrot.slane %v1069, 2
      %v1071 = vadd.f32 %v1069, %v1070
      %v1072 = vrot.slane %v1071, 1
      %v1073 = vadd.f32 %v1071, %v1072
      %v1074 = vld [vmem:[#allocation3] sm:$0xff]
      %v1075 = vld [vmem:[#allocation3 + $0x8] sm:$0xff]
      %v1076 = vld [vmem:[#allocation3 + $0x10] sm:$0xff]
      %v1077 = vld [vmem:[#allocation3 + $0x18] sm:$0xff]
      %v1078 = vsel %vm1060, %v1074, 0.0
      %v1079 = vsel %vm1060, %v1075, 0.0
      %v1080 = vadd.f32 %v1078, %v1079
      %v1081 = vsel %vm1060, %v1076, 0.0
      %v1082 = vadd.f32 %v1080, %v1081
      %v1083 = vsel %vm1060, %v1077, 0.0
      %v1084 = vadd.f32 %v1082, %v1083
      %v1085 = vrot.slane %v1084, 4
      %v1086 = vadd.f32 %v1084, %v1085
      %v1087 = vrot.slane %v1086, 2
      %v1088 = vadd.f32 %v1086, %v1087
      %v1089 = vrot.slane %v1088, 1
      %v1090 = vadd.f32 %v1088, %v1089
      %v1091 = vlaneseq
      %v1092 = vand.u32 %v1091, 127
      %vm1093 = vcmp.lt.s32.totalorder %v1092, 0
      %v1094 = vsub.s32 0, %v1092
      %v1095 = vsel %vm1093, %v1094, %v1092
      %v1096 = vshrl.u32 %v1095, 3
      %v1097 = vand.u32 %v1095, 7
      %v1098 = vsub.s32 0, %v1097
      %v1099 = vsel %vm1093, %v1098, %v1097
      %vm1100 = vcmp.ne.s32.totalorder %v1099, 0
      %vm1101 = vcmp.lt.s32.totalorder %v1099, 0
      %vm1102 = vmand %vm1101, %vm1100
      %v1103 = vadd.s32 %v1099, 8
      %v1104 = vsel %vm1102, %v1103, %v1099
      %vm1105 = vcmp.eq.s32.totalorder %v1104, 7
      %vm1106 = vcmask 516096
      %v1107 = vsel %vm1106, %v1073, 0.0
      %1108 = vadd.xlane.f32.xlu0 %v1107
      %v1109 = vpop.xlane.xlu0 %1108
      %v1110 = vrot.slane %v1109, 4
      %v1111 = vadd.f32 %v1109, %v1110
      %v1112 = vrot.slane %v1111, 2
      %v1113 = vadd.f32 %v1111, %v1112
      %v1114 = vrot.slane %v1113, 1
      %v1115 = vadd.f32 %v1113, %v1114
      %s1116 = vtos %v1115
      %s1117 = scalar_lea.smem [#allocation4], 0
      %1118 = sst [smem:[%s1117]] %s1116
      %v1119 = vsel %vm1106, %v1090, 0.0
      %1120 = vadd.xlane.f32.xlu0 %v1119
      %v1121 = vpop.xlane.xlu0 %1120
      %v1122 = vrot.slane %v1121, 4
      %v1123 = vadd.f32 %v1121, %v1122
      %v1124 = vrot.slane %v1123, 2
      %v1125 = vadd.f32 %v1123, %v1124
      %v1126 = vrot.slane %v1125, 1
      %v1127 = vadd.f32 %v1125, %v1126
      %s1128 = vtos %v1127
      %s1129 = scalar_lea.smem [#allocation4], 1
      %1130 = sst [smem:[%s1129]] %s1128
      %v1131 = vsel %vm1105, %v1073, 0.0
      %v1132 = vsel %vm1106, %v1131, 0.0
      %1133 = vadd.xlane.f32.xlu0 %v1132
      %v1134 = vpop.xlane.xlu0 %1133
      %v1135 = vrot.slane %v1134, 4
      %v1136 = vadd.f32 %v1134, %v1135
      %v1137 = vrot.slane %v1136, 2
      %v1138 = vadd.f32 %v1136, %v1137
      %v1139 = vrot.slane %v1138, 1
      %v1140 = vadd.f32 %v1138, %v1139
      %s1141 = vtos %v1140
      %s1142 = scalar_lea.smem [#allocation4], 2
      %1143 = sst [smem:[%s1142]] %s1141
      %v1144 = vsel %vm1105, %v1090, 0.0
      %v1145 = vsel %vm1106, %v1144, 0.0
      %1146 = vadd.xlane.f32.xlu0 %v1145
      %v1147 = vpop.xlane.xlu0 %1146
      %v1148 = vrot.slane %v1147, 4
      %v1149 = vadd.f32 %v1147, %v1148
      %v1150 = vrot.slane %v1149, 2
      %v1151 = vadd.f32 %v1149, %v1150
      %v1152 = vrot.slane %v1151, 1
      %v1153 = vadd.f32 %v1151, %v1152
      %s1154 = vtos %v1153
      %s1155 = scalar_lea.smem [#allocation4], 3
      %1156 = sst [smem:[%s1155]] %s1154
      %s1157 = scalar_lea.smem [#allocation4], 4
      %1158 = sst [smem:[%s1157]] 0.0
      %s1159 = scalar_lea.smem [#allocation4], 5
      %1160 = sst [smem:[%s1159]] 0.0
      %s1161 = scalar_lea.smem [#allocation4], 6
      %1162 = sst [smem:[%s1161]] 0.0
      %s1163 = scalar_lea.smem [#allocation4], 7
      %1164 = sst [smem:[%s1163]] 0.0
    $region33: #{tpu_custom_call.1} parent=1 // pred_fallthru
      _
    // Predicated region
    $region34: #{tpu_custom_call.1} parent=1 // pred_check
      _
    $region35: #{tpu_custom_call.1} parent=1 // pred_check_branch
      %1166 = sbr.rel (0) target = $region37
    $region36: #{tpu_custom_call.1} parent=1 // pred_region
      %s1168 = ssub.s32 16, 16
      %1169 = vsyncadd [#allocation5], %s1168
      %1172 = dma.smem_to_hbm [#allocation4], 16, %s4, [#allocation5]
    $region37: #{tpu_custom_call.1} parent=1 // pred_fallthru
      _
    // Predicated region
    $region38: #{tpu_custom_call.1} parent=1 // pred_check
      _
    $region39: #{tpu_custom_call.1} parent=1 // pred_check_branch
      %1174 = sbr.rel (0) target = $region41
    $region40: #{tpu_custom_call.1} parent=1 // pred_region
      %1175 = dma.done [#allocation5], 16
    $region41: #{tpu_custom_call.1} parent=1 // pred_fallthru
      _
    %1176 = sfence
    %1177 = vsyncpa [#allocation5], 1

</llo_original>
